<compile_context>
chip_gen: v6e
topology: v6e:2x2x1
jax: 0.10.0
libtpu: 0.0.40
codegen_flags: <defaults>
</compile_context>

<pallas_src>
import jax
import jax.numpy as jnp
from jax import lax
from jax.experimental import pallas as pl
from jax.experimental.pallas import tpu as pltpu

# "config" values implied by the module (kept small)
VOCAB = 20        # alphabet_dic['alphabet'].m_size
VOCAB_PAD = ((VOCAB + 7) // 8) * 8   # pad vocab to a sublane multiple for the one-hot matmul
EMBED = 32        # config.word_embed_dim
HIDDEN = 32       # config.hidden_size
NUM_LAYERS = 1    # config.hidden_layer
BIDIRECTIONAL = True
B = 2
T = 8
H = HIDDEN


def gate_lstm_kernel(tok_ref, len_ref, emb_ref, wih_ref, whh_ref, b_ref, out_ref):
    """Fused embedding + bidirectional LSTM with packed-sequence masking.

    tok_ref : [T*B, 1] int32   time-major token ids (row = t*B + b)
    len_ref : [B, 1]   int32   sequence lengths
    emb_ref : [VOCAB_PAD, E]   embedding table (zero-padded rows)
    wih_ref : [E, 8H]          gate-interleaved columns (i_f,i_b,f_f,f_b,g_f,g_b,o_f,o_b)
    whh_ref : [2H, 8H]         block structured: rows 0:H feed fwd gate cols, H:2H feed bwd
    b_ref   : [1, 8H]          b_ih + b_hh, gate-interleaved
    out_ref : [T, B, 2H]       per-timestep [h_fwd | h_bwd], zeros at padded steps
    """
    Tn, Bn, H2 = out_ref.shape
    Hn = H2 // 2
    TB, _ = tok_ref.shape
    vocab_pad = emb_ref.shape[0]

    # ---- hoisted: embedding lookup (one-hot matmul) + input projection --------
    tok = tok_ref[...]                                                  # [T*B, 1]
    vocab_iota = lax.broadcasted_iota(jnp.int32, (TB, vocab_pad), 1)
    onehot = (tok == vocab_iota).astype(jnp.float32)                    # [T*B, Vp]
    x_flat = jnp.dot(onehot, emb_ref[...],
                     preferred_element_type=jnp.float32)                # [T*B, E]
    gates_in = jnp.dot(x_flat, wih_ref[...],
                       preferred_element_type=jnp.float32) + b_ref[...] # [T*B, 8H]
    gin = [gates_in[t * Bn:(t + 1) * Bn, :] for t in range(Tn)]         # T x [B, 8H]

    whh = whh_ref[...]                                                  # [2H, 8H]
    lens = len_ref[...]                                                 # [B, 1]

    # column selectors (hoisted out of the loop)
    col8 = lax.broadcasted_iota(jnp.int32, (Bn, 8 * Hn), 1)
    fwd_cols = (col8 % (2 * Hn)) < Hn                                   # fwd sub-block of each gate
    col2 = lax.broadcasted_iota(jnp.int32, (Bn, 2 * Hn), 1)
    fwd_half = col2 < Hn                                                # fwd half of [h_fwd | h_bwd]

    h = jnp.zeros((Bn, 2 * Hn), jnp.float32)                            # [h_fwd | h_bwd]
    c = jnp.zeros((Bn, 2 * Hn), jnp.float32)

    out_f = [None] * Tn
    out_b = [None] * Tn

    # ---- fused fwd/bwd recurrence, statically unrolled (T small & fixed) ------
    for s in range(Tn):
        tf = s               # forward timestep
        tb = Tn - 1 - s      # backward timestep
        m_f = (lens > tf).astype(jnp.float32)                           # [B, 1]
        m_b = (lens > tb).astype(jnp.float32)                           # [B, 1]

        # fwd gate columns come from time tf, bwd gate columns from time tb
        gi = jnp.where(fwd_cols, gin[tf], gin[tb])                      # [B, 8H]
        gates = gi + jnp.dot(h, whh, preferred_element_type=jnp.float32)

        sig = jax.nn.sigmoid(gates)                                     # full-width EUP pass
        th = jnp.tanh(gates)                                            # full-width EUP pass
        i_g = sig[:, 0:2 * Hn]
        f_g = sig[:, 2 * Hn:4 * Hn]
        g_g = th[:, 4 * Hn:6 * Hn]
        o_g = sig[:, 6 * Hn:8 * Hn]

        c_new = f_g * c + i_g * g_g
        h_new = o_g * jnp.tanh(c_new)

        # padded steps freeze the state (pack_padded_sequence semantics)
        m = jnp.where(fwd_half, m_f, m_b)                               # [B, 2H]
        h = m * h_new + (1.0 - m) * h
        c = m * c_new + (1.0 - m) * c

        out_f[tf] = h[:, 0:Hn] * m_f
        out_b[tb] = h[:, Hn:2 * Hn] * m_b

    # ---- single store of the whole output (no per-step masked stores) ---------
    rows = [jnp.concatenate([out_f[t], out_b[t]], axis=-1)[None, :, :]
            for t in range(Tn)]
    out_ref[...] = jnp.concatenate(rows, axis=0)                        # [T, B, 2H]


def init_params(key):
    ks = jax.random.split(key, 12)
    # nn.init.uniform_(embedding.weight, -0.1, 0.1)
    embedding = jax.random.uniform(ks[0], (VOCAB, EMBED), jnp.float32, -0.1, 0.1)
    bound = 1.0 / (HIDDEN ** 0.5)

    def u(k, shape):
        return jax.random.uniform(k, shape, jnp.float32, -bound, bound)

    params = {
        "embedding": embedding,
        # forward-direction LSTM (weights stored transposed: [in, 4H], gate order i,f,g,o)
        "wih_f": u(ks[1], (EMBED, 4 * HIDDEN)),
        "whh_f": u(ks[2], (HIDDEN, 4 * HIDDEN)),
        "b_f": u(ks[3], (1, 4 * HIDDEN)) + u(ks[4], (1, 4 * HIDDEN)),
        # backward-direction LSTM
        "wih_b": u(ks[5], (EMBED, 4 * HIDDEN)),
        "whh_b": u(ks[6], (HIDDEN, 4 * HIDDEN)),
        "b_b": u(ks[7], (1, 4 * HIDDEN)) + u(ks[8], (1, 4 * HIDDEN)),
        # nn.Linear(4*hidden, 2): defined in __init__ but unused by forward()
        "linear_w": u(ks[9], (4 * HIDDEN, 2)),
        "linear_b": u(ks[10], (2,)),
    }
    return params


def _interleave_gates(a, b):
    """[R, 4H] x [R, 4H] -> [R, 8H] with per-gate interleave (a_i,b_i,a_f,b_f,a_g,b_g,a_o,b_o)."""
    r = a.shape[0]
    return jnp.stack([a.reshape(r, 4, H), b.reshape(r, 4, H)], axis=2).reshape(r, 8 * H)


def pack_lstm_params(params):
    """One-time parameter packing into the kernel's fused/interleaved layout."""
    zeros_h = jnp.zeros((H, 4 * H), jnp.float32)
    emb_pad = jnp.zeros((VOCAB_PAD, EMBED), jnp.float32).at[:VOCAB].set(params["embedding"])
    return {
        "embedding": emb_pad,                                              # [Vp, E]
        "wih_big": _interleave_gates(params["wih_f"], params["wih_b"]),    # [E, 8H]
        "whh_big": jnp.concatenate(
            [_interleave_gates(params["whh_f"], zeros_h),                  # h_fwd -> fwd gates
             _interleave_gates(zeros_h, params["whh_b"])], axis=0),        # h_bwd -> bwd gates
        "b_big": _interleave_gates(params["b_f"], params["b_b"]),          # [1, 8H]
    }


def gate_model_forward(tokens, lengths, packed):
    # Only trivial glue remains outside the kernel: token layout + output transpose.
    tok_tm = jnp.transpose(tokens, (1, 0)).reshape(T * B, 1).astype(jnp.int32)  # time-major
    len_col = lengths.reshape(B, 1).astype(jnp.int32)

    vmem = pl.BlockSpec(memory_space=pltpu.MemorySpace.VMEM)
    out_tbd = pl.pallas_call(
        gate_lstm_kernel,
        out_shape=jax.ShapeDtypeStruct((T, B, 2 * HIDDEN), jnp.float32),
        in_specs=[vmem] * 6,
        out_specs=vmem,
    )(tok_tm, len_col, packed["embedding"], packed["wih_big"],
      packed["whh_big"], packed["b_big"])

    # [T, B, 2H] -> [B, T, 2H] == pad_packed_sequence(..., batch_first=True)[0]
    return jnp.transpose(out_tbd, (1, 0, 2))


def gate_model_reference(tokens, lengths, params):
    """Pure-JAX reference (same math, per-direction loops) for a correctness check."""
    emb = params["embedding"][tokens]                                   # [B, T, E]

    def cell(x_t, h, c, wih, whh, b):
        gates = (jnp.dot(x_t, wih, precision=lax.Precision.HIGHEST)
                 + jnp.dot(h, whh, precision=lax.Precision.HIGHEST) + b)
        i = jax.nn.sigmoid(gates[:, 0:H])
        f = jax.nn.sigmoid(gates[:, H:2 * H])
        g = jnp.tanh(gates[:, 2 * H:3 * H])
        o = jax.nn.sigmoid(gates[:, 3 * H:4 * H])
        c = f * c + i * g
        h = o * jnp.tanh(c)
        return h, c

    h = jnp.zeros((B, H)); c = jnp.zeros((B, H)); outs_f = []
    for t in range(T):
        m = (lengths > t).astype(jnp.float32)[:, None]
        hn, cn = cell(emb[:, t], h, c, params["wih_f"], params["whh_f"], params["b_f"])
        h = m * hn + (1 - m) * h
        c = m * cn + (1 - m) * c
        outs_f.append(h * m)

    h = jnp.zeros((B, H)); c = jnp.zeros((B, H)); outs_b = [None] * T
    for t in range(T - 1, -1, -1):
        m = (lengths > t).astype(jnp.float32)[:, None]
        hn, cn = cell(emb[:, t], h, c, params["wih_b"], params["whh_b"], params["b_b"])
        h = m * hn + (1 - m) * h
        c = m * cn + (1 - m) * c
        outs_b[t] = h * m

    return jnp.stack([jnp.concatenate([outs_f[t], outs_b[t]], axis=-1)
                      for t in range(T)], axis=1)                       # [B, T, 2H]


if __name__ == "__main__":
    key = jax.random.PRNGKey(0)
    pkey, tkey = jax.random.split(key)
    params = init_params(pkey)
    packed = pack_lstm_params(params)

    tokens = jax.random.randint(tkey, (B, T), 0, VOCAB, dtype=jnp.int32)   # [2, 8]
    lengths = jnp.array([8, 5], dtype=jnp.int32)  # sorted descending, as pack_padded_sequence requires

    out = jax.jit(gate_model_forward)(tokens, lengths, packed)
    jax.block_until_ready(out)
    assert out.shape == (B, T, 2 * HIDDEN)

    ref = gate_model_reference(tokens, lengths, params)
    assert bool(jnp.allclose(out, ref, atol=2e-3, rtol=2e-3)), \
        float(jnp.max(jnp.abs(out - ref)))

    print("KERNEL_OK")
</pallas_src>

<mosaic_0001>
module attributes {stable_mosaic.version = 11 : i64} {
  func.func @gate_lstm_kernel(%arg0: memref<16x1xi32, #tpu.memory_space<vmem>>, %arg1: memref<2x1xi32, #tpu.memory_space<vmem>>, %arg2: memref<24x32xf32, #tpu.memory_space<vmem>>, %arg3: memref<32x256xf32, #tpu.memory_space<vmem>>, %arg4: memref<64x256xf32, #tpu.memory_space<vmem>>, %arg5: memref<1x256xf32, #tpu.memory_space<vmem>>, %arg6: memref<8x2x64xf32, #tpu.memory_space<vmem>>) attributes {dimension_semantics = [], scalar_prefetch = 0 : i64, scratch_operands = 0 : i64, tpu.core_type = #tpu.core_type<tc>} {
    %c0 = arith.constant 0 : index
    %c0_0 = arith.constant 0 : index
    %0 = vector.load %arg0[%c0, %c0_0] : memref<16x1xi32, #tpu.memory_space<vmem>>, vector<16x1xi32>
    %1 = tpu.iota {dimensions = array<i32: 1>} : vector<16x24xi32>
    %2 = vector.broadcast %0 : vector<16x1xi32> to vector<16x24xi32>
    %3 = arith.cmpi eq, %2, %1 : vector<16x24xi32>
    %4 = arith.extui %3 : vector<16x24xi1> to vector<16x24xi32>
    %5 = arith.sitofp %4 : vector<16x24xi32> to vector<16x24xf32>
    %c0_1 = arith.constant 0 : index
    %c0_2 = arith.constant 0 : index
    %6 = vector.load %arg2[%c0_1, %c0_2] : memref<24x32xf32, #tpu.memory_space<vmem>>, vector<24x32xf32>
    %cst = arith.constant dense<0.000000e+00> : vector<16x32xf32>
    %7 = tpu.matmul %5, %6, %cst {dimension_numbers = #tpu.dot_dimension_numbers<[1], [0], [0], [1], [0, 0, 1, 1], [], []>} : vector<16x24xf32>, vector<24x32xf32>, vector<16x32xf32> -> vector<16x32xf32>
    %c0_3 = arith.constant 0 : index
    %c0_4 = arith.constant 0 : index
    %8 = vector.load %arg3[%c0_3, %c0_4] : memref<32x256xf32, #tpu.memory_space<vmem>>, vector<32x256xf32>
    %cst_5 = arith.constant dense<0.000000e+00> : vector<16x256xf32>
    %9 = tpu.matmul %7, %8, %cst_5 {dimension_numbers = #tpu.dot_dimension_numbers<[1], [0], [0], [1], [0, 0, 1, 1], [], []>} : vector<16x32xf32>, vector<32x256xf32>, vector<16x256xf32> -> vector<16x256xf32>
    %c0_6 = arith.constant 0 : index
    %c0_7 = arith.constant 0 : index
    %10 = vector.load %arg5[%c0_6, %c0_7] : memref<1x256xf32, #tpu.memory_space<vmem>>, vector<1x256xf32>
    %11 = vector.broadcast %10 : vector<1x256xf32> to vector<16x256xf32>
    %12 = arith.addf %9, %11 : vector<16x256xf32>
    %13 = vector.extract_strided_slice %12 {offsets = [0, 0], sizes = [2, 256], strides = [1, 1]} : vector<16x256xf32> to vector<2x256xf32>
    %14 = vector.extract_strided_slice %12 {offsets = [2, 0], sizes = [2, 256], strides = [1, 1]} : vector<16x256xf32> to vector<2x256xf32>
    %15 = vector.extract_strided_slice %12 {offsets = [4, 0], sizes = [2, 256], strides = [1, 1]} : vector<16x256xf32> to vector<2x256xf32>
    %16 = vector.extract_strided_slice %12 {offsets = [6, 0], sizes = [2, 256], strides = [1, 1]} : vector<16x256xf32> to vector<2x256xf32>
    %17 = vector.extract_strided_slice %12 {offsets = [8, 0], sizes = [2, 256], strides = [1, 1]} : vector<16x256xf32> to vector<2x256xf32>
    %18 = vector.extract_strided_slice %12 {offsets = [10, 0], sizes = [2, 256], strides = [1, 1]} : vector<16x256xf32> to vector<2x256xf32>
    %19 = vector.extract_strided_slice %12 {offsets = [12, 0], sizes = [2, 256], strides = [1, 1]} : vector<16x256xf32> to vector<2x256xf32>
    %20 = vector.extract_strided_slice %12 {offsets = [14, 0], sizes = [2, 256], strides = [1, 1]} : vector<16x256xf32> to vector<2x256xf32>
    %c0_8 = arith.constant 0 : index
    %c0_9 = arith.constant 0 : index
    %21 = vector.load %arg4[%c0_8, %c0_9] : memref<64x256xf32, #tpu.memory_space<vmem>>, vector<64x256xf32>
    %c0_10 = arith.constant 0 : index
    %c0_11 = arith.constant 0 : index
    %22 = vector.load %arg1[%c0_10, %c0_11] : memref<2x1xi32, #tpu.memory_space<vmem>>, vector<2x1xi32>
    %23 = tpu.iota {dimensions = array<i32: 1>} : vector<2x256xi32>
    %c64_i32 = arith.constant 64 : i32
    %c0_i32 = arith.constant 0 : i32
    %24 = arith.cmpi eq, %c64_i32, %c0_i32 : i32
    %c1_i32 = arith.constant 1 : i32
    %25 = arith.select %24, %c1_i32, %c64_i32 : i32
    %26 = vector.broadcast %25 : i32 to vector<2x256xi32>
    %27 = arith.remsi %23, %26 : vector<2x256xi32>
    %c0_i32_12 = arith.constant 0 : i32
    %28 = vector.broadcast %c0_i32_12 : i32 to vector<2x256xi32>
    %29 = arith.cmpi ne, %27, %28 : vector<2x256xi32>
    %c0_i32_13 = arith.constant 0 : i32
    %30 = vector.broadcast %c0_i32_13 : i32 to vector<2x256xi32>
    %31 = arith.cmpi slt, %27, %30 : vector<2x256xi32>
    %c0_i32_14 = arith.constant 0 : i32
    %32 = arith.cmpi slt, %25, %c0_i32_14 : i32
    %33 = vector.broadcast %32 : i1 to vector<2x256xi1>
    %34 = vector.broadcast %33 : vector<2x256xi1> to vector<2x256xi1>
    %35 = arith.xori %31, %34 : vector<2x256xi1>
    %36 = arith.andi %35, %29 : vector<2x256xi1>
    %37 = vector.broadcast %25 : i32 to vector<2x256xi32>
    %38 = arith.addi %27, %37 : vector<2x256xi32>
    %39 = arith.select %36, %38, %27 : vector<2x256xi1>, vector<2x256xi32>
    %c32_i32 = arith.constant 32 : i32
    %40 = vector.broadcast %c32_i32 : i32 to vector<2x256xi32>
    %41 = arith.cmpi slt, %39, %40 : vector<2x256xi32>
    %42 = tpu.iota {dimensions = array<i32: 1>} : vector<2x64xi32>
    %c32_i32_15 = arith.constant 32 : i32
    %43 = vector.broadcast %c32_i32_15 : i32 to vector<2x64xi32>
    %44 = arith.cmpi slt, %42, %43 : vector<2x64xi32>
    %cst_16 = arith.constant 0.000000e+00 : f32
    %45 = vector.broadcast %cst_16 : f32 to vector<2x64xf32>
    %cst_17 = arith.constant 0.000000e+00 : f32
    %46 = vector.broadcast %cst_17 : f32 to vector<2x64xf32>
    %c0_i32_18 = arith.constant 0 : i32
    %47 = vector.broadcast %c0_i32_18 : i32 to vector<2x1xi32>
    %48 = arith.cmpi sgt, %22, %47 : vector<2x1xi32>
    %49 = arith.extui %48 : vector<2x1xi1> to vector<2x1xi32>
    %50 = arith.sitofp %49 : vector<2x1xi32> to vector<2x1xf32>
    %c7_i32 = arith.constant 7 : i32
    %51 = vector.broadcast %c7_i32 : i32 to vector<2x1xi32>
    %52 = arith.cmpi sgt, %22, %51 : vector<2x1xi32>
    %53 = arith.extui %52 : vector<2x1xi1> to vector<2x1xi32>
    %54 = arith.sitofp %53 : vector<2x1xi32> to vector<2x1xf32>
    %55 = arith.select %41, %13, %20 : vector<2x256xi1>, vector<2x256xf32>
    %cst_19 = arith.constant dense<0.000000e+00> : vector<2x256xf32>
    %56 = tpu.matmul %45, %21, %cst_19 {dimension_numbers = #tpu.dot_dimension_numbers<[1], [0], [0], [1], [0, 0, 1, 1], [], []>} : vector<2x64xf32>, vector<64x256xf32>, vector<2x256xf32> -> vector<2x256xf32>
    %57 = arith.addf %55, %56 : vector<2x256xf32>
    %58 = arith.negf %57 : vector<2x256xf32>
    %59 = math.exp %58 : vector<2x256xf32>
    %cst_20 = arith.constant 1.000000e+00 : f32
    %60 = vector.broadcast %cst_20 : f32 to vector<2x256xf32>
    %61 = arith.addf %60, %59 : vector<2x256xf32>
    %62 = arith.divf %60, %61 : vector<2x256xf32>
    %63 = math.tanh %57 : vector<2x256xf32>
    %64 = vector.extract_strided_slice %62 {offsets = [0, 0], sizes = [2, 64], strides = [1, 1]} : vector<2x256xf32> to vector<2x64xf32>
    %65 = vector.extract_strided_slice %62 {offsets = [0, 64], sizes = [2, 64], strides = [1, 1]} : vector<2x256xf32> to vector<2x64xf32>
    %66 = vector.extract_strided_slice %63 {offsets = [0, 128], sizes = [2, 64], strides = [1, 1]} : vector<2x256xf32> to vector<2x64xf32>
    %67 = vector.extract_strided_slice %62 {offsets = [0, 192], sizes = [2, 64], strides = [1, 1]} : vector<2x256xf32> to vector<2x64xf32>
    %68 = arith.mulf %65, %46 : vector<2x64xf32>
    %69 = arith.mulf %64, %66 : vector<2x64xf32>
    %70 = arith.addf %68, %69 : vector<2x64xf32>
    %71 = math.tanh %70 : vector<2x64xf32>
    %72 = arith.mulf %67, %71 : vector<2x64xf32>
    %73 = vector.shape_cast %50 : vector<2x1xf32> to vector<2x1xf32>
    %74 = vector.broadcast %73 : vector<2x1xf32> to vector<2x64xf32>
    %75 = vector.shape_cast %54 : vector<2x1xf32> to vector<2x1xf32>
    %76 = vector.broadcast %75 : vector<2x1xf32> to vector<2x64xf32>
    %77 = arith.select %44, %74, %76 : vector<2x64xi1>, vector<2x64xf32>
    %78 = arith.mulf %77, %72 : vector<2x64xf32>
    %cst_21 = arith.constant 1.000000e+00 : f32
    %79 = vector.broadcast %cst_21 : f32 to vector<2x64xf32>
    %80 = arith.subf %79, %77 : vector<2x64xf32>
    %81 = arith.mulf %80, %45 : vector<2x64xf32>
    %82 = arith.addf %78, %81 : vector<2x64xf32>
    %83 = arith.mulf %77, %70 : vector<2x64xf32>
    %cst_22 = arith.constant 1.000000e+00 : f32
    %84 = vector.broadcast %cst_22 : f32 to vector<2x64xf32>
    %85 = arith.subf %84, %77 : vector<2x64xf32>
    %86 = arith.mulf %85, %46 : vector<2x64xf32>
    %87 = arith.addf %83, %86 : vector<2x64xf32>
    %88 = vector.extract_strided_slice %82 {offsets = [0, 0], sizes = [2, 32], strides = [1, 1]} : vector<2x64xf32> to vector<2x32xf32>
    %89 = vector.broadcast %50 : vector<2x1xf32> to vector<2x32xf32>
    %90 = arith.mulf %88, %89 : vector<2x32xf32>
    %91 = vector.extract_strided_slice %82 {offsets = [0, 32], sizes = [2, 32], strides = [1, 1]} : vector<2x64xf32> to vector<2x32xf32>
    %92 = vector.broadcast %54 : vector<2x1xf32> to vector<2x32xf32>
    %93 = arith.mulf %91, %92 : vector<2x32xf32>
    %c1_i32_23 = arith.constant 1 : i32
    %94 = vector.broadcast %c1_i32_23 : i32 to vector<2x1xi32>
    %95 = arith.cmpi sgt, %22, %94 : vector<2x1xi32>
    %96 = arith.extui %95 : vector<2x1xi1> to vector<2x1xi32>
    %97 = arith.sitofp %96 : vector<2x1xi32> to vector<2x1xf32>
    %c6_i32 = arith.constant 6 : i32
    %98 = vector.broadcast %c6_i32 : i32 to vector<2x1xi32>
    %99 = arith.cmpi sgt, %22, %98 : vector<2x1xi32>
    %100 = arith.extui %99 : vector<2x1xi1> to vector<2x1xi32>
    %101 = arith.sitofp %100 : vector<2x1xi32> to vector<2x1xf32>
    %102 = arith.select %41, %14, %19 : vector<2x256xi1>, vector<2x256xf32>
    %cst_24 = arith.constant dense<0.000000e+00> : vector<2x256xf32>
    %103 = tpu.matmul %82, %21, %cst_24 {dimension_numbers = #tpu.dot_dimension_numbers<[1], [0], [0], [1], [0, 0, 1, 1], [], []>} : vector<2x64xf32>, vector<64x256xf32>, vector<2x256xf32> -> vector<2x256xf32>
    %104 = arith.addf %102, %103 : vector<2x256xf32>
    %105 = arith.negf %104 : vector<2x256xf32>
    %106 = math.exp %105 : vector<2x256xf32>
    %cst_25 = arith.constant 1.000000e+00 : f32
    %107 = vector.broadcast %cst_25 : f32 to vector<2x256xf32>
    %108 = arith.addf %107, %106 : vector<2x256xf32>
    %109 = arith.divf %107, %108 : vector<2x256xf32>
    %110 = math.tanh %104 : vector<2x256xf32>
    %111 = vector.extract_strided_slice %109 {offsets = [0, 0], sizes = [2, 64], strides = [1, 1]} : vector<2x256xf32> to vector<2x64xf32>
    %112 = vector.extract_strided_slice %109 {offsets = [0, 64], sizes = [2, 64], strides = [1, 1]} : vector<2x256xf32> to vector<2x64xf32>
    %113 = vector.extract_strided_slice %110 {offsets = [0, 128], sizes = [2, 64], strides = [1, 1]} : vector<2x256xf32> to vector<2x64xf32>
    %114 = vector.extract_strided_slice %109 {offsets = [0, 192], sizes = [2, 64], strides = [1, 1]} : vector<2x256xf32> to vector<2x64xf32>
    %115 = arith.mulf %112, %87 : vector<2x64xf32>
    %116 = arith.mulf %111, %113 : vector<2x64xf32>
    %117 = arith.addf %115, %116 : vector<2x64xf32>
    %118 = math.tanh %117 : vector<2x64xf32>
    %119 = arith.mulf %114, %118 : vector<2x64xf32>
    %120 = vector.shape_cast %97 : vector<2x1xf32> to vector<2x1xf32>
    %121 = vector.broadcast %120 : vector<2x1xf32> to vector<2x64xf32>
    %122 = vector.shape_cast %101 : vector<2x1xf32> to vector<2x1xf32>
    %123 = vector.broadcast %122 : vector<2x1xf32> to vector<2x64xf32>
    %124 = arith.select %44, %121, %123 : vector<2x64xi1>, vector<2x64xf32>
    %125 = arith.mulf %124, %119 : vector<2x64xf32>
    %cst_26 = arith.constant 1.000000e+00 : f32
    %126 = vector.broadcast %cst_26 : f32 to vector<2x64xf32>
    %127 = arith.subf %126, %124 : vector<2x64xf32>
    %128 = arith.mulf %127, %82 : vector<2x64xf32>
    %129 = arith.addf %125, %128 : vector<2x64xf32>
    %130 = arith.mulf %124, %117 : vector<2x64xf32>
    %cst_27 = arith.constant 1.000000e+00 : f32
    %131 = vector.broadcast %cst_27 : f32 to vector<2x64xf32>
    %132 = arith.subf %131, %124 : vector<2x64xf32>
    %133 = arith.mulf %132, %87 : vector<2x64xf32>
    %134 = arith.addf %130, %133 : vector<2x64xf32>
    %135 = vector.extract_strided_slice %129 {offsets = [0, 0], sizes = [2, 32], strides = [1, 1]} : vector<2x64xf32> to vector<2x32xf32>
    %136 = vector.broadcast %97 : vector<2x1xf32> to vector<2x32xf32>
    %137 = arith.mulf %135, %136 : vector<2x32xf32>
    %138 = vector.extract_strided_slice %129 {offsets = [0, 32], sizes = [2, 32], strides = [1, 1]} : vector<2x64xf32> to vector<2x32xf32>
    %139 = vector.broadcast %101 : vector<2x1xf32> to vector<2x32xf32>
    %140 = arith.mulf %138, %139 : vector<2x32xf32>
    %c2_i32 = arith.constant 2 : i32
    %141 = vector.broadcast %c2_i32 : i32 to vector<2x1xi32>
    %142 = arith.cmpi sgt, %22, %141 : vector<2x1xi32>
    %143 = arith.extui %142 : vector<2x1xi1> to vector<2x1xi32>
    %144 = arith.sitofp %143 : vector<2x1xi32> to vector<2x1xf32>
    %c5_i32 = arith.constant 5 : i32
    %145 = vector.broadcast %c5_i32 : i32 to vector<2x1xi32>
    %146 = arith.cmpi sgt, %22, %145 : vector<2x1xi32>
    %147 = arith.extui %146 : vector<2x1xi1> to vector<2x1xi32>
    %148 = arith.sitofp %147 : vector<2x1xi32> to vector<2x1xf32>
    %149 = arith.select %41, %15, %18 : vector<2x256xi1>, vector<2x256xf32>
    %cst_28 = arith.constant dense<0.000000e+00> : vector<2x256xf32>
    %150 = tpu.matmul %129, %21, %cst_28 {dimension_numbers = #tpu.dot_dimension_numbers<[1], [0], [0], [1], [0, 0, 1, 1], [], []>} : vector<2x64xf32>, vector<64x256xf32>, vector<2x256xf32> -> vector<2x256xf32>
    %151 = arith.addf %149, %150 : vector<2x256xf32>
    %152 = arith.negf %151 : vector<2x256xf32>
    %153 = math.exp %152 : vector<2x256xf32>
    %cst_29 = arith.constant 1.000000e+00 : f32
    %154 = vector.broadcast %cst_29 : f32 to vector<2x256xf32>
    %155 = arith.addf %154, %153 : vector<2x256xf32>
    %156 = arith.divf %154, %155 : vector<2x256xf32>
    %157 = math.tanh %151 : vector<2x256xf32>
    %158 = vector.extract_strided_slice %156 {offsets = [0, 0], sizes = [2, 64], strides = [1, 1]} : vector<2x256xf32> to vector<2x64xf32>
    %159 = vector.extract_strided_slice %156 {offsets = [0, 64], sizes = [2, 64], strides = [1, 1]} : vector<2x256xf32> to vector<2x64xf32>
    %160 = vector.extract_strided_slice %157 {offsets = [0, 128], sizes = [2, 64], strides = [1, 1]} : vector<2x256xf32> to vector<2x64xf32>
    %161 = vector.extract_strided_slice %156 {offsets = [0, 192], sizes = [2, 64], strides = [1, 1]} : vector<2x256xf32> to vector<2x64xf32>
    %162 = arith.mulf %159, %134 : vector<2x64xf32>
    %163 = arith.mulf %158, %160 : vector<2x64xf32>
    %164 = arith.addf %162, %163 : vector<2x64xf32>
    %165 = math.tanh %164 : vector<2x64xf32>
    %166 = arith.mulf %161, %165 : vector<2x64xf32>
    %167 = vector.shape_cast %144 : vector<2x1xf32> to vector<2x1xf32>
    %168 = vector.broadcast %167 : vector<2x1xf32> to vector<2x64xf32>
    %169 = vector.shape_cast %148 : vector<2x1xf32> to vector<2x1xf32>
    %170 = vector.broadcast %169 : vector<2x1xf32> to vector<2x64xf32>
    %171 = arith.select %44, %168, %170 : vector<2x64xi1>, vector<2x64xf32>
    %172 = arith.mulf %171, %166 : vector<2x64xf32>
    %cst_30 = arith.constant 1.000000e+00 : f32
    %173 = vector.broadcast %cst_30 : f32 to vector<2x64xf32>
    %174 = arith.subf %173, %171 : vector<2x64xf32>
    %175 = arith.mulf %174, %129 : vector<2x64xf32>
    %176 = arith.addf %172, %175 : vector<2x64xf32>
    %177 = arith.mulf %171, %164 : vector<2x64xf32>
    %cst_31 = arith.constant 1.000000e+00 : f32
    %178 = vector.broadcast %cst_31 : f32 to vector<2x64xf32>
    %179 = arith.subf %178, %171 : vector<2x64xf32>
    %180 = arith.mulf %179, %134 : vector<2x64xf32>
    %181 = arith.addf %177, %180 : vector<2x64xf32>
    %182 = vector.extract_strided_slice %176 {offsets = [0, 0], sizes = [2, 32], strides = [1, 1]} : vector<2x64xf32> to vector<2x32xf32>
    %183 = vector.broadcast %144 : vector<2x1xf32> to vector<2x32xf32>
    %184 = arith.mulf %182, %183 : vector<2x32xf32>
    %185 = vector.extract_strided_slice %176 {offsets = [0, 32], sizes = [2, 32], strides = [1, 1]} : vector<2x64xf32> to vector<2x32xf32>
    %186 = vector.broadcast %148 : vector<2x1xf32> to vector<2x32xf32>
    %187 = arith.mulf %185, %186 : vector<2x32xf32>
    %c3_i32 = arith.constant 3 : i32
    %188 = vector.broadcast %c3_i32 : i32 to vector<2x1xi32>
    %189 = arith.cmpi sgt, %22, %188 : vector<2x1xi32>
    %190 = arith.extui %189 : vector<2x1xi1> to vector<2x1xi32>
    %191 = arith.sitofp %190 : vector<2x1xi32> to vector<2x1xf32>
    %c4_i32 = arith.constant 4 : i32
    %192 = vector.broadcast %c4_i32 : i32 to vector<2x1xi32>
    %193 = arith.cmpi sgt, %22, %192 : vector<2x1xi32>
    %194 = arith.extui %193 : vector<2x1xi1> to vector<2x1xi32>
    %195 = arith.sitofp %194 : vector<2x1xi32> to vector<2x1xf32>
    %196 = arith.select %41, %16, %17 : vector<2x256xi1>, vector<2x256xf32>
    %cst_32 = arith.constant dense<0.000000e+00> : vector<2x256xf32>
    %197 = tpu.matmul %176, %21, %cst_32 {dimension_numbers = #tpu.dot_dimension_numbers<[1], [0], [0], [1], [0, 0, 1, 1], [], []>} : vector<2x64xf32>, vector<64x256xf32>, vector<2x256xf32> -> vector<2x256xf32>
    %198 = arith.addf %196, %197 : vector<2x256xf32>
    %199 = arith.negf %198 : vector<2x256xf32>
    %200 = math.exp %199 : vector<2x256xf32>
    %cst_33 = arith.constant 1.000000e+00 : f32
    %201 = vector.broadcast %cst_33 : f32 to vector<2x256xf32>
    %202 = arith.addf %201, %200 : vector<2x256xf32>
    %203 = arith.divf %201, %202 : vector<2x256xf32>
    %204 = math.tanh %198 : vector<2x256xf32>
    %205 = vector.extract_strided_slice %203 {offsets = [0, 0], sizes = [2, 64], strides = [1, 1]} : vector<2x256xf32> to vector<2x64xf32>
    %206 = vector.extract_strided_slice %203 {offsets = [0, 64], sizes = [2, 64], strides = [1, 1]} : vector<2x256xf32> to vector<2x64xf32>
    %207 = vector.extract_strided_slice %204 {offsets = [0, 128], sizes = [2, 64], strides = [1, 1]} : vector<2x256xf32> to vector<2x64xf32>
    %208 = vector.extract_strided_slice %203 {offsets = [0, 192], sizes = [2, 64], strides = [1, 1]} : vector<2x256xf32> to vector<2x64xf32>
    %209 = arith.mulf %206, %181 : vector<2x64xf32>
    %210 = arith.mulf %205, %207 : vector<2x64xf32>
    %211 = arith.addf %209, %210 : vector<2x64xf32>
    %212 = math.tanh %211 : vector<2x64xf32>
    %213 = arith.mulf %208, %212 : vector<2x64xf32>
    %214 = vector.shape_cast %191 : vector<2x1xf32> to vector<2x1xf32>
    %215 = vector.broadcast %214 : vector<2x1xf32> to vector<2x64xf32>
    %216 = vector.shape_cast %195 : vector<2x1xf32> to vector<2x1xf32>
    %217 = vector.broadcast %216 : vector<2x1xf32> to vector<2x64xf32>
    %218 = arith.select %44, %215, %217 : vector<2x64xi1>, vector<2x64xf32>
    %219 = arith.mulf %218, %213 : vector<2x64xf32>
    %cst_34 = arith.constant 1.000000e+00 : f32
    %220 = vector.broadcast %cst_34 : f32 to vector<2x64xf32>
    %221 = arith.subf %220, %218 : vector<2x64xf32>
    %222 = arith.mulf %221, %176 : vector<2x64xf32>
    %223 = arith.addf %219, %222 : vector<2x64xf32>
    %224 = arith.mulf %218, %211 : vector<2x64xf32>
    %cst_35 = arith.constant 1.000000e+00 : f32
    %225 = vector.broadcast %cst_35 : f32 to vector<2x64xf32>
    %226 = arith.subf %225, %218 : vector<2x64xf32>
    %227 = arith.mulf %226, %181 : vector<2x64xf32>
    %228 = arith.addf %224, %227 : vector<2x64xf32>
    %229 = vector.extract_strided_slice %223 {offsets = [0, 0], sizes = [2, 32], strides = [1, 1]} : vector<2x64xf32> to vector<2x32xf32>
    %230 = vector.broadcast %191 : vector<2x1xf32> to vector<2x32xf32>
    %231 = arith.mulf %229, %230 : vector<2x32xf32>
    %232 = vector.extract_strided_slice %223 {offsets = [0, 32], sizes = [2, 32], strides = [1, 1]} : vector<2x64xf32> to vector<2x32xf32>
    %233 = vector.broadcast %195 : vector<2x1xf32> to vector<2x32xf32>
    %234 = arith.mulf %232, %233 : vector<2x32xf32>
    %c4_i32_36 = arith.constant 4 : i32
    %235 = vector.broadcast %c4_i32_36 : i32 to vector<2x1xi32>
    %236 = arith.cmpi sgt, %22, %235 : vector<2x1xi32>
    %237 = arith.extui %236 : vector<2x1xi1> to vector<2x1xi32>
    %238 = arith.sitofp %237 : vector<2x1xi32> to vector<2x1xf32>
    %c3_i32_37 = arith.constant 3 : i32
    %239 = vector.broadcast %c3_i32_37 : i32 to vector<2x1xi32>
    %240 = arith.cmpi sgt, %22, %239 : vector<2x1xi32>
    %241 = arith.extui %240 : vector<2x1xi1> to vector<2x1xi32>
    %242 = arith.sitofp %241 : vector<2x1xi32> to vector<2x1xf32>
    %243 = arith.select %41, %17, %16 : vector<2x256xi1>, vector<2x256xf32>
    %cst_38 = arith.constant dense<0.000000e+00> : vector<2x256xf32>
    %244 = tpu.matmul %223, %21, %cst_38 {dimension_numbers = #tpu.dot_dimension_numbers<[1], [0], [0], [1], [0, 0, 1, 1], [], []>} : vector<2x64xf32>, vector<64x256xf32>, vector<2x256xf32> -> vector<2x256xf32>
    %245 = arith.addf %243, %244 : vector<2x256xf32>
    %246 = arith.negf %245 : vector<2x256xf32>
    %247 = math.exp %246 : vector<2x256xf32>
    %cst_39 = arith.constant 1.000000e+00 : f32
    %248 = vector.broadcast %cst_39 : f32 to vector<2x256xf32>
    %249 = arith.addf %248, %247 : vector<2x256xf32>
    %250 = arith.divf %248, %249 : vector<2x256xf32>
    %251 = math.tanh %245 : vector<2x256xf32>
    %252 = vector.extract_strided_slice %250 {offsets = [0, 0], sizes = [2, 64], strides = [1, 1]} : vector<2x256xf32> to vector<2x64xf32>
    %253 = vector.extract_strided_slice %250 {offsets = [0, 64], sizes = [2, 64], strides = [1, 1]} : vector<2x256xf32> to vector<2x64xf32>
    %254 = vector.extract_strided_slice %251 {offsets = [0, 128], sizes = [2, 64], strides = [1, 1]} : vector<2x256xf32> to vector<2x64xf32>
    %255 = vector.extract_strided_slice %250 {offsets = [0, 192], sizes = [2, 64], strides = [1, 1]} : vector<2x256xf32> to vector<2x64xf32>
    %256 = arith.mulf %253, %228 : vector<2x64xf32>
    %257 = arith.mulf %252, %254 : vector<2x64xf32>
    %258 = arith.addf %256, %257 : vector<2x64xf32>
    %259 = math.tanh %258 : vector<2x64xf32>
    %260 = arith.mulf %255, %259 : vector<2x64xf32>
    %261 = vector.shape_cast %238 : vector<2x1xf32> to vector<2x1xf32>
    %262 = vector.broadcast %261 : vector<2x1xf32> to vector<2x64xf32>
    %263 = vector.shape_cast %242 : vector<2x1xf32> to vector<2x1xf32>
    %264 = vector.broadcast %263 : vector<2x1xf32> to vector<2x64xf32>
    %265 = arith.select %44, %262, %264 : vector<2x64xi1>, vector<2x64xf32>
    %266 = arith.mulf %265, %260 : vector<2x64xf32>
    %cst_40 = arith.constant 1.000000e+00 : f32
    %267 = vector.broadcast %cst_40 : f32 to vector<2x64xf32>
    %268 = arith.subf %267, %265 : vector<2x64xf32>
    %269 = arith.mulf %268, %223 : vector<2x64xf32>
    %270 = arith.addf %266, %269 : vector<2x64xf32>
    %271 = arith.mulf %265, %258 : vector<2x64xf32>
    %cst_41 = arith.constant 1.000000e+00 : f32
    %272 = vector.broadcast %cst_41 : f32 to vector<2x64xf32>
    %273 = arith.subf %272, %265 : vector<2x64xf32>
    %274 = arith.mulf %273, %228 : vector<2x64xf32>
    %275 = arith.addf %271, %274 : vector<2x64xf32>
    %276 = vector.extract_strided_slice %270 {offsets = [0, 0], sizes = [2, 32], strides = [1, 1]} : vector<2x64xf32> to vector<2x32xf32>
    %277 = vector.broadcast %238 : vector<2x1xf32> to vector<2x32xf32>
    %278 = arith.mulf %276, %277 : vector<2x32xf32>
    %279 = vector.extract_strided_slice %270 {offsets = [0, 32], sizes = [2, 32], strides = [1, 1]} : vector<2x64xf32> to vector<2x32xf32>
    %280 = vector.broadcast %242 : vector<2x1xf32> to vector<2x32xf32>
    %281 = arith.mulf %279, %280 : vector<2x32xf32>
    %c5_i32_42 = arith.constant 5 : i32
    %282 = vector.broadcast %c5_i32_42 : i32 to vector<2x1xi32>
    %283 = arith.cmpi sgt, %22, %282 : vector<2x1xi32>
    %284 = arith.extui %283 : vector<2x1xi1> to vector<2x1xi32>
    %285 = arith.sitofp %284 : vector<2x1xi32> to vector<2x1xf32>
    %c2_i32_43 = arith.constant 2 : i32
    %286 = vector.broadcast %c2_i32_43 : i32 to vector<2x1xi32>
    %287 = arith.cmpi sgt, %22, %286 : vector<2x1xi32>
    %288 = arith.extui %287 : vector<2x1xi1> to vector<2x1xi32>
    %289 = arith.sitofp %288 : vector<2x1xi32> to vector<2x1xf32>
    %290 = arith.select %41, %18, %15 : vector<2x256xi1>, vector<2x256xf32>
    %cst_44 = arith.constant dense<0.000000e+00> : vector<2x256xf32>
    %291 = tpu.matmul %270, %21, %cst_44 {dimension_numbers = #tpu.dot_dimension_numbers<[1], [0], [0], [1], [0, 0, 1, 1], [], []>} : vector<2x64xf32>, vector<64x256xf32>, vector<2x256xf32> -> vector<2x256xf32>
    %292 = arith.addf %290, %291 : vector<2x256xf32>
    %293 = arith.negf %292 : vector<2x256xf32>
    %294 = math.exp %293 : vector<2x256xf32>
    %cst_45 = arith.constant 1.000000e+00 : f32
    %295 = vector.broadcast %cst_45 : f32 to vector<2x256xf32>
    %296 = arith.addf %295, %294 : vector<2x256xf32>
    %297 = arith.divf %295, %296 : vector<2x256xf32>
    %298 = math.tanh %292 : vector<2x256xf32>
    %299 = vector.extract_strided_slice %297 {offsets = [0, 0], sizes = [2, 64], strides = [1, 1]} : vector<2x256xf32> to vector<2x64xf32>
    %300 = vector.extract_strided_slice %297 {offsets = [0, 64], sizes = [2, 64], strides = [1, 1]} : vector<2x256xf32> to vector<2x64xf32>
    %301 = vector.extract_strided_slice %298 {offsets = [0, 128], sizes = [2, 64], strides = [1, 1]} : vector<2x256xf32> to vector<2x64xf32>
    %302 = vector.extract_strided_slice %297 {offsets = [0, 192], sizes = [2, 64], strides = [1, 1]} : vector<2x256xf32> to vector<2x64xf32>
    %303 = arith.mulf %300, %275 : vector<2x64xf32>
    %304 = arith.mulf %299, %301 : vector<2x64xf32>
    %305 = arith.addf %303, %304 : vector<2x64xf32>
    %306 = math.tanh %305 : vector<2x64xf32>
    %307 = arith.mulf %302, %306 : vector<2x64xf32>
    %308 = vector.shape_cast %285 : vector<2x1xf32> to vector<2x1xf32>
    %309 = vector.broadcast %308 : vector<2x1xf32> to vector<2x64xf32>
    %310 = vector.shape_cast %289 : vector<2x1xf32> to vector<2x1xf32>
    %311 = vector.broadcast %310 : vector<2x1xf32> to vector<2x64xf32>
    %312 = arith.select %44, %309, %311 : vector<2x64xi1>, vector<2x64xf32>
    %313 = arith.mulf %312, %307 : vector<2x64xf32>
    %cst_46 = arith.constant 1.000000e+00 : f32
    %314 = vector.broadcast %cst_46 : f32 to vector<2x64xf32>
    %315 = arith.subf %314, %312 : vector<2x64xf32>
    %316 = arith.mulf %315, %270 : vector<2x64xf32>
    %317 = arith.addf %313, %316 : vector<2x64xf32>
    %318 = arith.mulf %312, %305 : vector<2x64xf32>
    %cst_47 = arith.constant 1.000000e+00 : f32
    %319 = vector.broadcast %cst_47 : f32 to vector<2x64xf32>
    %320 = arith.subf %319, %312 : vector<2x64xf32>
    %321 = arith.mulf %320, %275 : vector<2x64xf32>
    %322 = arith.addf %318, %321 : vector<2x64xf32>
    %323 = vector.extract_strided_slice %317 {offsets = [0, 0], sizes = [2, 32], strides = [1, 1]} : vector<2x64xf32> to vector<2x32xf32>
    %324 = vector.broadcast %285 : vector<2x1xf32> to vector<2x32xf32>
    %325 = arith.mulf %323, %324 : vector<2x32xf32>
    %326 = vector.extract_strided_slice %317 {offsets = [0, 32], sizes = [2, 32], strides = [1, 1]} : vector<2x64xf32> to vector<2x32xf32>
    %327 = vector.broadcast %289 : vector<2x1xf32> to vector<2x32xf32>
    %328 = arith.mulf %326, %327 : vector<2x32xf32>
    %c6_i32_48 = arith.constant 6 : i32
    %329 = vector.broadcast %c6_i32_48 : i32 to vector<2x1xi32>
    %330 = arith.cmpi sgt, %22, %329 : vector<2x1xi32>
    %331 = arith.extui %330 : vector<2x1xi1> to vector<2x1xi32>
    %332 = arith.sitofp %331 : vector<2x1xi32> to vector<2x1xf32>
    %c1_i32_49 = arith.constant 1 : i32
    %333 = vector.broadcast %c1_i32_49 : i32 to vector<2x1xi32>
    %334 = arith.cmpi sgt, %22, %333 : vector<2x1xi32>
    %335 = arith.extui %334 : vector<2x1xi1> to vector<2x1xi32>
    %336 = arith.sitofp %335 : vector<2x1xi32> to vector<2x1xf32>
    %337 = arith.select %41, %19, %14 : vector<2x256xi1>, vector<2x256xf32>
    %cst_50 = arith.constant dense<0.000000e+00> : vector<2x256xf32>
    %338 = tpu.matmul %317, %21, %cst_50 {dimension_numbers = #tpu.dot_dimension_numbers<[1], [0], [0], [1], [0, 0, 1, 1], [], []>} : vector<2x64xf32>, vector<64x256xf32>, vector<2x256xf32> -> vector<2x256xf32>
    %339 = arith.addf %337, %338 : vector<2x256xf32>
    %340 = arith.negf %339 : vector<2x256xf32>
    %341 = math.exp %340 : vector<2x256xf32>
    %cst_51 = arith.constant 1.000000e+00 : f32
    %342 = vector.broadcast %cst_51 : f32 to vector<2x256xf32>
    %343 = arith.addf %342, %341 : vector<2x256xf32>
    %344 = arith.divf %342, %343 : vector<2x256xf32>
    %345 = math.tanh %339 : vector<2x256xf32>
    %346 = vector.extract_strided_slice %344 {offsets = [0, 0], sizes = [2, 64], strides = [1, 1]} : vector<2x256xf32> to vector<2x64xf32>
    %347 = vector.extract_strided_slice %344 {offsets = [0, 64], sizes = [2, 64], strides = [1, 1]} : vector<2x256xf32> to vector<2x64xf32>
    %348 = vector.extract_strided_slice %345 {offsets = [0, 128], sizes = [2, 64], strides = [1, 1]} : vector<2x256xf32> to vector<2x64xf32>
    %349 = vector.extract_strided_slice %344 {offsets = [0, 192], sizes = [2, 64], strides = [1, 1]} : vector<2x256xf32> to vector<2x64xf32>
    %350 = arith.mulf %347, %322 : vector<2x64xf32>
    %351 = arith.mulf %346, %348 : vector<2x64xf32>
    %352 = arith.addf %350, %351 : vector<2x64xf32>
    %353 = math.tanh %352 : vector<2x64xf32>
    %354 = arith.mulf %349, %353 : vector<2x64xf32>
    %355 = vector.shape_cast %332 : vector<2x1xf32> to vector<2x1xf32>
    %356 = vector.broadcast %355 : vector<2x1xf32> to vector<2x64xf32>
    %357 = vector.shape_cast %336 : vector<2x1xf32> to vector<2x1xf32>
    %358 = vector.broadcast %357 : vector<2x1xf32> to vector<2x64xf32>
    %359 = arith.select %44, %356, %358 : vector<2x64xi1>, vector<2x64xf32>
    %360 = arith.mulf %359, %354 : vector<2x64xf32>
    %cst_52 = arith.constant 1.000000e+00 : f32
    %361 = vector.broadcast %cst_52 : f32 to vector<2x64xf32>
    %362 = arith.subf %361, %359 : vector<2x64xf32>
    %363 = arith.mulf %362, %317 : vector<2x64xf32>
    %364 = arith.addf %360, %363 : vector<2x64xf32>
    %365 = arith.mulf %359, %352 : vector<2x64xf32>
    %cst_53 = arith.constant 1.000000e+00 : f32
    %366 = vector.broadcast %cst_53 : f32 to vector<2x64xf32>
    %367 = arith.subf %366, %359 : vector<2x64xf32>
    %368 = arith.mulf %367, %322 : vector<2x64xf32>
    %369 = arith.addf %365, %368 : vector<2x64xf32>
    %370 = vector.extract_strided_slice %364 {offsets = [0, 0], sizes = [2, 32], strides = [1, 1]} : vector<2x64xf32> to vector<2x32xf32>
    %371 = vector.broadcast %332 : vector<2x1xf32> to vector<2x32xf32>
    %372 = arith.mulf %370, %371 : vector<2x32xf32>
    %373 = vector.extract_strided_slice %364 {offsets = [0, 32], sizes = [2, 32], strides = [1, 1]} : vector<2x64xf32> to vector<2x32xf32>
    %374 = vector.broadcast %336 : vector<2x1xf32> to vector<2x32xf32>
    %375 = arith.mulf %373, %374 : vector<2x32xf32>
    %c7_i32_54 = arith.constant 7 : i32
    %376 = vector.broadcast %c7_i32_54 : i32 to vector<2x1xi32>
    %377 = arith.cmpi sgt, %22, %376 : vector<2x1xi32>
    %378 = arith.extui %377 : vector<2x1xi1> to vector<2x1xi32>
    %379 = arith.sitofp %378 : vector<2x1xi32> to vector<2x1xf32>
    %c0_i32_55 = arith.constant 0 : i32
    %380 = vector.broadcast %c0_i32_55 : i32 to vector<2x1xi32>
    %381 = arith.cmpi sgt, %22, %380 : vector<2x1xi32>
    %382 = arith.extui %381 : vector<2x1xi1> to vector<2x1xi32>
    %383 = arith.sitofp %382 : vector<2x1xi32> to vector<2x1xf32>
    %384 = arith.select %41, %20, %13 : vector<2x256xi1>, vector<2x256xf32>
    %cst_56 = arith.constant dense<0.000000e+00> : vector<2x256xf32>
    %385 = tpu.matmul %364, %21, %cst_56 {dimension_numbers = #tpu.dot_dimension_numbers<[1], [0], [0], [1], [0, 0, 1, 1], [], []>} : vector<2x64xf32>, vector<64x256xf32>, vector<2x256xf32> -> vector<2x256xf32>
    %386 = arith.addf %384, %385 : vector<2x256xf32>
    %387 = arith.negf %386 : vector<2x256xf32>
    %388 = math.exp %387 : vector<2x256xf32>
    %cst_57 = arith.constant 1.000000e+00 : f32
    %389 = vector.broadcast %cst_57 : f32 to vector<2x256xf32>
    %390 = arith.addf %389, %388 : vector<2x256xf32>
    %391 = arith.divf %389, %390 : vector<2x256xf32>
    %392 = math.tanh %386 : vector<2x256xf32>
    %393 = vector.extract_strided_slice %391 {offsets = [0, 0], sizes = [2, 64], strides = [1, 1]} : vector<2x256xf32> to vector<2x64xf32>
    %394 = vector.extract_strided_slice %391 {offsets = [0, 64], sizes = [2, 64], strides = [1, 1]} : vector<2x256xf32> to vector<2x64xf32>
    %395 = vector.extract_strided_slice %392 {offsets = [0, 128], sizes = [2, 64], strides = [1, 1]} : vector<2x256xf32> to vector<2x64xf32>
    %396 = vector.extract_strided_slice %391 {offsets = [0, 192], sizes = [2, 64], strides = [1, 1]} : vector<2x256xf32> to vector<2x64xf32>
    %397 = arith.mulf %394, %369 : vector<2x64xf32>
    %398 = arith.mulf %393, %395 : vector<2x64xf32>
    %399 = arith.addf %397, %398 : vector<2x64xf32>
    %400 = math.tanh %399 : vector<2x64xf32>
    %401 = arith.mulf %396, %400 : vector<2x64xf32>
    %402 = vector.shape_cast %379 : vector<2x1xf32> to vector<2x1xf32>
    %403 = vector.broadcast %402 : vector<2x1xf32> to vector<2x64xf32>
    %404 = vector.shape_cast %383 : vector<2x1xf32> to vector<2x1xf32>
    %405 = vector.broadcast %404 : vector<2x1xf32> to vector<2x64xf32>
    %406 = arith.select %44, %403, %405 : vector<2x64xi1>, vector<2x64xf32>
    %407 = arith.mulf %406, %401 : vector<2x64xf32>
    %cst_58 = arith.constant 1.000000e+00 : f32
    %408 = vector.broadcast %cst_58 : f32 to vector<2x64xf32>
    %409 = arith.subf %408, %406 : vector<2x64xf32>
    %410 = arith.mulf %409, %364 : vector<2x64xf32>
    %411 = arith.addf %407, %410 : vector<2x64xf32>
    %412 = vector.extract_strided_slice %411 {offsets = [0, 0], sizes = [2, 32], strides = [1, 1]} : vector<2x64xf32> to vector<2x32xf32>
    %413 = vector.broadcast %379 : vector<2x1xf32> to vector<2x32xf32>
    %414 = arith.mulf %412, %413 : vector<2x32xf32>
    %415 = vector.extract_strided_slice %411 {offsets = [0, 32], sizes = [2, 32], strides = [1, 1]} : vector<2x64xf32> to vector<2x32xf32>
    %416 = vector.broadcast %383 : vector<2x1xf32> to vector<2x32xf32>
    %417 = arith.mulf %415, %416 : vector<2x32xf32>
    %418 = tpu.concatenate %90, %417 in 1 : vector<2x32xf32>, vector<2x32xf32> -> vector<2x64xf32>
    %419 = vector.shape_cast %418 : vector<2x64xf32> to vector<1x2x64xf32>
    %420 = tpu.concatenate %137, %375 in 1 : vector<2x32xf32>, vector<2x32xf32> -> vector<2x64xf32>
    %421 = vector.shape_cast %420 : vector<2x64xf32> to vector<1x2x64xf32>
    %422 = tpu.concatenate %184, %328 in 1 : vector<2x32xf32>, vector<2x32xf32> -> vector<2x64xf32>
    %423 = vector.shape_cast %422 : vector<2x64xf32> to vector<1x2x64xf32>
    %424 = tpu.concatenate %231, %281 in 1 : vector<2x32xf32>, vector<2x32xf32> -> vector<2x64xf32>
    %425 = vector.shape_cast %424 : vector<2x64xf32> to vector<1x2x64xf32>
    %426 = tpu.concatenate %278, %234 in 1 : vector<2x32xf32>, vector<2x32xf32> -> vector<2x64xf32>
    %427 = vector.shape_cast %426 : vector<2x64xf32> to vector<1x2x64xf32>
    %428 = tpu.concatenate %325, %187 in 1 : vector<2x32xf32>, vector<2x32xf32> -> vector<2x64xf32>
    %429 = vector.shape_cast %428 : vector<2x64xf32> to vector<1x2x64xf32>
    %430 = tpu.concatenate %372, %140 in 1 : vector<2x32xf32>, vector<2x32xf32> -> vector<2x64xf32>
    %431 = vector.shape_cast %430 : vector<2x64xf32> to vector<1x2x64xf32>
    %432 = tpu.concatenate %414, %93 in 1 : vector<2x32xf32>, vector<2x32xf32> -> vector<2x64xf32>
    %433 = vector.shape_cast %432 : vector<2x64xf32> to vector<1x2x64xf32>
    %434 = tpu.concatenate %419, %421, %423, %425, %427, %429, %431, %433 in 0 : vector<1x2x64xf32>, vector<1x2x64xf32>, vector<1x2x64xf32>, vector<1x2x64xf32>, vector<1x2x64xf32>, vector<1x2x64xf32>, vector<1x2x64xf32>, vector<1x2x64xf32> -> vector<8x2x64xf32>
    %c0_59 = arith.constant 0 : index
    %c0_60 = arith.constant 0 : index
    %c0_61 = arith.constant 0 : index
    %435 = vector.load %arg6[%c0_59, %c0_60, %c0_61] : memref<8x2x64xf32, #tpu.memory_space<vmem>>, vector<8x2x64xf32>
    tpu.vector_store %arg6[%c0_59, %c0_60, %c0_61], %434 {strides = array<i32>} : memref<8x2x64xf32, #tpu.memory_space<vmem>>, vector<8x2x64xf32>,
    return
  }
}

</mosaic_0001>

<llo_original>
// kernel: gate_model_forward.1
$region0: #{gate_model_forward.1}
  #allocation0 [shape = 'u32[]', space=smem, size = 0x4, offset = 0x4, fixed_abs, tag = 'smem constant byte address 0x4 - core index']
  #allocation1 [shape = 'u32[144,128]{1,0:T(1,128)}', space=vmem, size = 0x12000, scoped, tag = 'internal scratch']
  %s0 = inlined_call_operand.vmem [shape: s32[16,1], index: 0, kind: input, shape index: {}]
  %s1 = inlined_call_operand.vmem [shape: s32[2,1], index: 1, kind: input, shape index: {}]
  %s2 = inlined_call_operand.vmem [shape: f32[24,32], index: 2, kind: input, shape index: {}]
  %s3 = inlined_call_operand.hbm [shape: f32[32,256], index: 3, kind: input, shape index: {}]
  %s4 = inlined_call_operand.hbm [shape: f32[64,256], index: 4, kind: input, shape index: {}]
  %s5 = inlined_call_operand.vmem [shape: f32[1,256], index: 5, kind: input, shape index: {}]
  %s6 = inlined_call_operand.vmem [shape: f32[8,2,64], index: 6, kind: output, shape index: {}]
  %s7 = sld [smem:[#allocation0]]
  $region42: #{gate_model_forward.1} parent=0
    _
  %s9 = ssub.s32 1, %s7
  %s10 = scalar_select 0, %s9, %s7
  $region1: #{gate_model_forward.1} parent=0
    #allocation2 [shape = 'u8[32768]{0}', space=vmem, size = 0x8000, scoped, tag = 'input window, operand 3, single buffered']
    #allocation3 [shape = 's32[1]{0}', space=sflag, size = 0x4, scoped, tag = 'scoped memory for gate_model_forward.1']
    #allocation4 [shape = 'u8[65536]{0}', space=vmem, size = 0x10000, scoped, tag = 'input window, operand 4, single buffered']
    #allocation5 [shape = 's32[1]{0}', space=sflag, size = 0x4, scoped, tag = 'scoped memory for gate_model_forward.1']
    %11 = vsyncpa [#allocation3], 0
    %12 = vsyncpa [#allocation5], 0
    // Predicated region
    $region2: #{gate_model_forward.1} parent=1 // pred_check
      _
    $region3: #{gate_model_forward.1} parent=1 // pred_check_branch
      %14 = sbr.rel (0) target = $region5
    $region4: #{gate_model_forward.1} parent=1 // pred_region
      _
    $region5: #{gate_model_forward.1} parent=1 // pred_fallthru
      _
    // Predicated region
    $region6: #{gate_model_forward.1} parent=1 // pred_check
      _
    $region7: #{gate_model_forward.1} parent=1 // pred_check_branch
      %16 = sbr.rel (0) target = $region9
    $region8: #{gate_model_forward.1} parent=1 // pred_region
      _
    $region9: #{gate_model_forward.1} parent=1 // pred_fallthru
      _
    // Predicated region
    $region10: #{gate_model_forward.1} parent=1 // pred_check
      _
    $region11: #{gate_model_forward.1} parent=1 // pred_check_branch
      %18 = sbr.rel (0) target = $region13
    $region12: #{gate_model_forward.1} parent=1 // pred_region
      _
    $region13: #{gate_model_forward.1} parent=1 // pred_fallthru
      _
    // Predicated region
    $region14: #{gate_model_forward.1} parent=1 // pred_check
      _
    $region15: #{gate_model_forward.1} parent=1 // pred_check_branch
      %20 = sbr.rel (0) target = $region17
    $region16: #{gate_model_forward.1} parent=1 // pred_region
      %s22 = ssub.s32 1024, 1024
      %23 = vsyncadd [#allocation3], %s22
      %s24 = sshll.u32 [#allocation2], 4
      %s25 = int_to_ptr.vmem [resolvable:$true] %s24
      %30 = dma.hbm_to_vmem [thread:$0]  %s3, 1024, %s25, [#allocation3], 256, 256, 16
    $region17: #{gate_model_forward.1} parent=1 // pred_fallthru
      _
    // Predicated region
    $region18: #{gate_model_forward.1} parent=1 // pred_check
      _
    $region19: #{gate_model_forward.1} parent=1 // pred_check_branch
      %32 = sbr.rel (0) target = $region21
    $region20: #{gate_model_forward.1} parent=1 // pred_region
      %s34 = ssub.s32 2048, 2048
      %35 = vsyncadd [#allocation5], %s34
      %s36 = sshll.u32 [#allocation4], 4
      %s37 = int_to_ptr.vmem [resolvable:$true] %s36
      %42 = dma.hbm_to_vmem [thread:$0]  %s4, 2048, %s37, [#allocation5], 256, 256, 16
    $region21: #{gate_model_forward.1} parent=1 // pred_fallthru
      _
    // Predicated region
    $region22: #{gate_model_forward.1} parent=1 // pred_check
      _
    $region23: #{gate_model_forward.1} parent=1 // pred_check_branch
      %44 = sbr.rel (0) target = $region25
    $region24: #{gate_model_forward.1} parent=1 // pred_region
      _
    $region25: #{gate_model_forward.1} parent=1 // pred_fallthru
      _
    // Predicated region
    $region26: #{gate_model_forward.1} parent=1 // pred_check
      _
    $region27: #{gate_model_forward.1} parent=1 // pred_check_branch
      %46 = sbr.rel (0) target = $region29
    $region28: #{gate_model_forward.1} parent=1 // pred_region
      %47 = dma.done [#allocation3], 1024
    $region29: #{gate_model_forward.1} parent=1 // pred_fallthru
      _
    // Predicated region
    $region30: #{gate_model_forward.1} parent=1 // pred_check
      _
    $region31: #{gate_model_forward.1} parent=1 // pred_check_branch
      %49 = sbr.rel (0) target = $region33
    $region32: #{gate_model_forward.1} parent=1 // pred_region
      %50 = dma.done [#allocation5], 2048
    $region33: #{gate_model_forward.1} parent=1 // pred_fallthru
      _
    %v51 = vld [vmem:[%s0] sm:$0xff]
    %v52 = vld [vmem:[%s0 + $0x8] sm:$0xff]
    %v53 = vlaneseq
    %v54 = vand.u32 %v53, 127
    %55 = vset.pattern.permute.xlu0 0
    %56 = vperm.xlu0 %55, %v51
    %v57 = vpop.permute.xlu0 %56
    %58 = vset.pattern.permute.xlu0 0
    %59 = vperm.xlu0 %58, %v52
    %v60 = vpop.permute.xlu0 %59
    %vm61 = vcmp.eq.s32.totalorder %v57, %v54
    %vm62 = vcmp.eq.s32.totalorder %v60, %v54
    %v63 = vsel %vm61, 1, 0
    %v64 = vsel %vm62, 1, 0
    %v65 = vcvt.s32.f32 %v63
    %v66 = vcvt.s32.f32 %v64
    %v67 = vld [vmem:[%s2] sm:$0xff]
    %v68 = vld [vmem:[%s2 + $0x8] sm:$0xff]
    %v69 = vld [vmem:[%s2 + $0x10] sm:$0xff]
    %vm70 = vcmask 195584
    %v72 = vsel %vm70, %v65, 0
    %v75 = vsel %vm70, %v66, 0
    %77 = vmatprep.subr.mxu0 0.0
    %78 = vmatpush1.msra.mxu0 0.0
    %79 = vmatprep.subr.mxu0 0.0
    %80 = vmatpush1.msra.mxu0 0.0
    %81 = vmatprep.subr.mxu0 0.0
    %82 = vmatpush1.msra.mxu0 0.0
    %83 = vmatprep.subr.mxu0 0.0
    %84 = vmatpush1.msra.mxu0 0.0
    %85 = vmatprep.subr.mxu0 0.0
    %86 = vmatpush1.msra.mxu0 0.0
    %87 = vmatprep.subr.mxu0 0.0
    %88 = vmatpush1.msra.mxu0 0.0
    %89 = vmatprep.subr.mxu0 0.0
    %90 = vmatpush1.msra.mxu0 0.0
    %91 = vmatprep.subr.mxu0 0.0
    %92 = vmatpush1.msra.mxu0 0.0
    %93 = vmatprep.subr.mxu0 0.0
    %94 = vmatpush1.msra.mxu0 0.0
    %95 = vmatprep.subr.mxu0 0.0
    %96 = vmatpush1.msra.mxu0 0.0
    %97 = vmatprep.subr.mxu0 0.0
    %98 = vmatpush1.msra.mxu0 0.0
    %99 = vmatprep.subr.mxu0 0.0
    %100 = vmatpush1.msra.mxu0 0.0
    %101 = vmatprep.subr.mxu0 0.0
    %102 = vmatpush1.msra.mxu0 0.0
    %103 = vmatprep.subr.mxu0 0.0
    %104 = vmatpush1.msra.mxu0 %v69
    %105 = vmatprep.subr.mxu0 0.0
    %106 = vmatpush1.msra.mxu0 %v68
    %107 = vmatprep.subr.mxu0 0.0
    %108 = vmatpush1.msra.mxu0 %v67
    %109 = vmatprep.subr.mxu0 0.0
    %110 = vmatpush2.msra.mxu0 0.0
    %111 = vmatprep.subr.mxu0 0.0
    %112 = vmatpush2.msra.mxu0 0.0
    %113 = vmatprep.subr.mxu0 0.0
    %114 = vmatpush2.msra.mxu0 0.0
    %115 = vmatprep.subr.mxu0 0.0
    %116 = vmatpush2.msra.mxu0 0.0
    %117 = vmatprep.subr.mxu0 0.0
    %118 = vmatpush2.msra.mxu0 0.0
    %119 = vmatprep.subr.mxu0 0.0
    %120 = vmatpush2.msra.mxu0 0.0
    %121 = vmatprep.subr.mxu0 0.0
    %122 = vmatpush2.msra.mxu0 0.0
    %123 = vmatprep.subr.mxu0 0.0
    %124 = vmatpush2.msra.mxu0 0.0
    %125 = vmatprep.subr.mxu0 0.0
    %126 = vmatpush2.msra.mxu0 0.0
    %127 = vmatprep.subr.mxu0 0.0
    %128 = vmatpush2.msra.mxu0 0.0
    %129 = vmatprep.subr.mxu0 0.0
    %130 = vmatpush2.msra.mxu0 0.0
    %131 = vmatprep.subr.mxu0 0.0
    %132 = vmatpush2.msra.mxu0 0.0
    %133 = vmatprep.subr.mxu0 0.0
    %134 = vmatpush2.msra.mxu0 0.0
    %135 = vmatprep.subr.mxu0 0.0
    %136 = vmatpush2.msra.mxu0 0.0
    %137 = vmatprep.subr.mxu0 0.0
    %138 = vmatpush2.msra.mxu0 0.0
    %139 = vmatprep.subr.mxu0 0.0
    %140 = vmatpush2.msra.mxu0 0.0
    %141 = vmatprep.mubr.f32.mxu0 0.0
    %142 = vmatmul.mubr.f32.gmra.mxu0 %v72
    %v143 = vpop.f32.mrf.mxu0
    %v144 = vadd.f32 0.0, %v143
    %v145 = vpop.f32.mrf.mxu0
    %146 = vmatprep.mubr.f32.mxu0 0.0
    %147 = vmatmul.mubr.f32.gmra.mxu0 %v75
    %v148 = vpop.f32.mrf.mxu0
    %v149 = vadd.f32 0.0, %v148
    %v150 = vpop.f32.mrf.mxu0
    %151 = vdwg.mxu0
    %v152 = vld [vmem:[#allocation2] sm:$0xff]
    %v153 = vld [vmem:[#allocation2 + $0x8] sm:$0xff]
    %v154 = vld [vmem:[#allocation2 + $0x10] sm:$0xff]
    %v155 = vld [vmem:[#allocation2 + $0x18] sm:$0xff]
    %v156 = vld [vmem:[#allocation2 + $0x20] sm:$0xff]
    %v157 = vld [vmem:[#allocation2 + $0x28] sm:$0xff]
    %v158 = vld [vmem:[#allocation2 + $0x30] sm:$0xff]
    %v159 = vld [vmem:[#allocation2 + $0x38] sm:$0xff]
    %v160 = vld [vmem:[%s5] sm:$0x3]
    %v162 = vlaneseq
    %v163 = vshrl.u32 %v162, 7
    %v164 = vsub.s32 0, %v163
    %v165 = vrot.slane %v160, %v164
    %v166 = vlaneseq
    %v167 = vshrl.u32 %v166, 7
    %v168 = vsub.s32 1, %v167
    %v169 = vrot.slane %v160, %v168
    %vm172 = vcmask 261120
    %v174 = vsel %vm172, %v144, 0
    %v177 = vsel %vm172, %v149, 0
    %179 = vmatprep.subr.mxu0 0.0
    %180 = vmatpush1.msra.mxu0 0.0
    %181 = vmatprep.subr.mxu0 0.0
    %182 = vmatpush1.msra.mxu0 0.0
    %183 = vmatprep.subr.mxu0 0.0
    %184 = vmatpush1.msra.mxu0 0.0
    %185 = vmatprep.subr.mxu0 0.0
    %186 = vmatpush1.msra.mxu0 0.0
    %187 = vmatprep.subr.mxu0 0.0
    %188 = vmatpush1.msra.mxu0 0.0
    %189 = vmatprep.subr.mxu0 0.0
    %190 = vmatpush1.msra.mxu0 0.0
    %191 = vmatprep.subr.mxu0 0.0
    %192 = vmatpush1.msra.mxu0 0.0
    %193 = vmatprep.subr.mxu0 0.0
    %194 = vmatpush1.msra.mxu0 0.0
    %195 = vmatprep.subr.mxu0 0.0
    %196 = vmatpush1.msra.mxu0 0.0
    %197 = vmatprep.subr.mxu0 0.0
    %198 = vmatpush1.msra.mxu0 0.0
    %199 = vmatprep.subr.mxu0 0.0
    %200 = vmatpush1.msra.mxu0 0.0
    %201 = vmatprep.subr.mxu0 0.0
    %202 = vmatpush1.msra.mxu0 0.0
    %203 = vmatprep.subr.mxu0 %v159
    %204 = vmatpush1.msra.mxu0 %v158
    %205 = vmatprep.subr.mxu0 %v157
    %206 = vmatpush1.msra.mxu0 %v156
    %207 = vmatprep.subr.mxu0 %v155
    %208 = vmatpush1.msra.mxu0 %v154
    %209 = vmatprep.subr.mxu0 %v153
    %210 = vmatpush1.msra.mxu0 %v152
    %211 = vmatprep.subr.mxu0 0.0
    %212 = vmatpush2.msra.mxu0 0.0
    %213 = vmatprep.subr.mxu0 0.0
    %214 = vmatpush2.msra.mxu0 0.0
    %215 = vmatprep.subr.mxu0 0.0
    %216 = vmatpush2.msra.mxu0 0.0
    %217 = vmatprep.subr.mxu0 0.0
    %218 = vmatpush2.msra.mxu0 0.0
    %219 = vmatprep.subr.mxu0 0.0
    %220 = vmatpush2.msra.mxu0 0.0
    %221 = vmatprep.subr.mxu0 0.0
    %222 = vmatpush2.msra.mxu0 0.0
    %223 = vmatprep.subr.mxu0 0.0
    %224 = vmatpush2.msra.mxu0 0.0
    %225 = vmatprep.subr.mxu0 0.0
    %226 = vmatpush2.msra.mxu0 0.0
    %227 = vmatprep.subr.mxu0 0.0
    %228 = vmatpush2.msra.mxu0 0.0
    %229 = vmatprep.subr.mxu0 0.0
    %230 = vmatpush2.msra.mxu0 0.0
    %231 = vmatprep.subr.mxu0 0.0
    %232 = vmatpush2.msra.mxu0 0.0
    %233 = vmatprep.subr.mxu0 0.0
    %234 = vmatpush2.msra.mxu0 0.0
    %235 = vmatprep.subr.mxu0 0.0
    %236 = vmatpush2.msra.mxu0 0.0
    %237 = vmatprep.subr.mxu0 0.0
    %238 = vmatpush2.msra.mxu0 0.0
    %239 = vmatprep.subr.mxu0 0.0
    %240 = vmatpush2.msra.mxu0 0.0
    %241 = vmatprep.subr.mxu0 0.0
    %242 = vmatpush2.msra.mxu0 0.0
    %243 = vmatprep.mubr.f32.mxu0 0.0
    %244 = vmatmul.mubr.f32.gmra.mxu0 %v174
    %v245 = vpop.f32.mrf.mxu0
    %v246 = vadd.f32 %v165, %v245
    %v247 = vpop.f32.mrf.mxu0
    %v248 = vadd.f32 %v169, %v247
    %249 = vmatprep.mubr.f32.mxu0 0.0
    %250 = vmatmul.mubr.f32.gmra.mxu0 %v177
    %v251 = vpop.f32.mrf.mxu0
    %v252 = vadd.f32 %v165, %v251
    %v253 = vpop.f32.mrf.mxu0
    %v254 = vadd.f32 %v169, %v253
    %255 = vdwg.mxu0
    %v256 = vld [vmem:[#allocation4] sm:$0xff]
    %v257 = vld [vmem:[#allocation4 + $0x8] sm:$0xff]
    %v258 = vld [vmem:[#allocation4 + $0x10] sm:$0xff]
    %v259 = vld [vmem:[#allocation4 + $0x18] sm:$0xff]
    %v260 = vld [vmem:[#allocation4 + $0x20] sm:$0xff]
    %v261 = vld [vmem:[#allocation4 + $0x28] sm:$0xff]
    %v262 = vld [vmem:[#allocation4 + $0x30] sm:$0xff]
    %v263 = vld [vmem:[#allocation4 + $0x38] sm:$0xff]
    %v264 = vld [vmem:[#allocation4 + $0x40] sm:$0xff]
    %v265 = vld [vmem:[#allocation4 + $0x48] sm:$0xff]
    %v266 = vld [vmem:[#allocation4 + $0x50] sm:$0xff]
    %v267 = vld [vmem:[#allocation4 + $0x58] sm:$0xff]
    %v268 = vld [vmem:[#allocation4 + $0x60] sm:$0xff]
    %v269 = vld [vmem:[#allocation4 + $0x68] sm:$0xff]
    %v270 = vld [vmem:[#allocation4 + $0x70] sm:$0xff]
    %v271 = vld [vmem:[#allocation4 + $0x78] sm:$0xff]
    %v272 = vld [vmem:[%s1] sm:$0x3]
    %v273 = vadd.s32 %v54, 128
    %vm274 = vcmp.lt.s32.totalorder %v54, 0
    %v275 = vsub.s32 0, %v54
    %v276 = vsel %vm274, %v275, %v54
    %v277 = vshrl.u32 %v276, 6
    %v278 = vand.u32 %v276, 63
    %v279 = vsub.s32 0, %v278
    %v280 = vsel %vm274, %v279, %v278
    %vm281 = vcmp.lt.s32.totalorder %v273, 0
    %v282 = vsub.s32 0, %v273
    %v283 = vsel %vm281, %v282, %v273
    %v284 = vshrl.u32 %v283, 6
    %v285 = vand.u32 %v283, 63
    %v286 = vsub.s32 0, %v285
    %v287 = vsel %vm281, %v286, %v285
    %vm288 = vcmp.ne.s32.totalorder %v280, 0
    %vm289 = vcmp.ne.s32.totalorder %v287, 0
    %vm290 = vcmp.lt.s32.totalorder %v280, 0
    %vm291 = vcmp.lt.s32.totalorder %v287, 0
    %vm292 = vmand %vm290, %vm288
    %vm293 = vmand %vm291, %vm289
    %v294 = vadd.s32 %v280, 64
    %v295 = vadd.s32 %v287, 64
    %v296 = vsel %vm292, %v294, %v280
    %v297 = vsel %vm293, %v295, %v287
    %vm298 = vcmp.lt.s32.totalorder %v296, 32
    %vm299 = vcmp.lt.s32.totalorder %v297, 32
    %vm300 = vcmp.lt.s32.totalorder %v54, 32
    %vm301 = vcmp.gt.s32.totalorder %v272, 0
    %v302 = vsel %vm301, 1, 0
    %v303 = vcvt.s32.f32 %v302
    %vm304 = vcmp.gt.s32.totalorder %v272, 7
    %v305 = vsel %vm304, 1, 0
    %v306 = vcvt.s32.f32 %v305
    %v309 = vrot.slane %v252, 6
    %v310 = vrot.slane %v254, 6
    %v313 = vsel %vm298, %v246, %v309
    %v314 = vsel %vm299, %v248, %v310
    %vm315 = vcmask 523264
    %v317 = vsel %vm315, 0.0, 0
    %319 = vmatprep.subr.mxu0 0.0
    %320 = vmatpush1.msra.mxu0 0.0
    %321 = vmatprep.subr.mxu0 0.0
    %322 = vmatpush1.msra.mxu0 0.0
    %323 = vmatprep.subr.mxu0 0.0
    %324 = vmatpush1.msra.mxu0 0.0
    %325 = vmatprep.subr.mxu0 0.0
    %326 = vmatpush1.msra.mxu0 0.0
    %327 = vmatprep.subr.mxu0 0.0
    %328 = vmatpush1.msra.mxu0 0.0
    %329 = vmatprep.subr.mxu0 0.0
    %330 = vmatpush1.msra.mxu0 0.0
    %331 = vmatprep.subr.mxu0 0.0
    %332 = vmatpush1.msra.mxu0 0.0
    %333 = vmatprep.subr.mxu0 0.0
    %334 = vmatpush1.msra.mxu0 0.0
    %335 = vmatprep.subr.mxu0 %v271
    %336 = vmatpush1.msra.mxu0 %v270
    %337 = vmatprep.subr.mxu0 %v269
    %338 = vmatpush1.msra.mxu0 %v268
    %339 = vmatprep.subr.mxu0 %v267
    %340 = vmatpush1.msra.mxu0 %v266
    %341 = vmatprep.subr.mxu0 %v265
    %342 = vmatpush1.msra.mxu0 %v264
    %343 = vmatprep.subr.mxu0 %v263
    %344 = vmatpush1.msra.mxu0 %v262
    %345 = vmatprep.subr.mxu0 %v261
    %346 = vmatpush1.msra.mxu0 %v260
    %347 = vmatprep.subr.mxu0 %v259
    %348 = vmatpush1.msra.mxu0 %v258
    %349 = vmatprep.subr.mxu0 %v257
    %350 = vmatpush1.msra.mxu0 %v256
    %351 = vmatprep.subr.mxu0 0.0
    %352 = vmatpush2.msra.mxu0 0.0
    %353 = vmatprep.subr.mxu0 0.0
    %354 = vmatpush2.msra.mxu0 0.0
    %355 = vmatprep.subr.mxu0 0.0
    %356 = vmatpush2.msra.mxu0 0.0
    %357 = vmatprep.subr.mxu0 0.0
    %358 = vmatpush2.msra.mxu0 0.0
    %359 = vmatprep.subr.mxu0 0.0
    %360 = vmatpush2.msra.mxu0 0.0
    %361 = vmatprep.subr.mxu0 0.0
    %362 = vmatpush2.msra.mxu0 0.0
    %363 = vmatprep.subr.mxu0 0.0
    %364 = vmatpush2.msra.mxu0 0.0
    %365 = vmatprep.subr.mxu0 0.0
    %366 = vmatpush2.msra.mxu0 0.0
    %367 = vmatprep.subr.mxu0 0.0
    %368 = vmatpush2.msra.mxu0 0.0
    %369 = vmatprep.subr.mxu0 0.0
    %370 = vmatpush2.msra.mxu0 0.0
    %371 = vmatprep.subr.mxu0 0.0
    %372 = vmatpush2.msra.mxu0 0.0
    %373 = vmatprep.subr.mxu0 0.0
    %374 = vmatpush2.msra.mxu0 0.0
    %375 = vmatprep.subr.mxu0 0.0
    %376 = vmatpush2.msra.mxu0 0.0
    %377 = vmatprep.subr.mxu0 0.0
    %378 = vmatpush2.msra.mxu0 0.0
    %379 = vmatprep.subr.mxu0 0.0
    %380 = vmatpush2.msra.mxu0 0.0
    %381 = vmatprep.subr.mxu0 0.0
    %382 = vmatpush2.msra.mxu0 0.0
    %383 = vmatprep.mubr.f32.mxu0 0.0
    %384 = vmatmul.mubr.f32.gmra.mxu0 %v317
    %v385 = vpop.f32.mrf.mxu0
    %v386 = vadd.f32 0.0, %v385
    %v387 = vpop.f32.mrf.mxu0
    %v388 = vadd.f32 0.0, %v387
    %389 = vdwg.mxu0
    %v390 = vadd.f32 %v313, %v386
    %v391 = vadd.f32 %v314, %v388
    %v392 = vxor.u32 %v390, 2147483648
    %v393 = vxor.u32 %v391, 2147483648
    %v394 = vmul.f32 %v392, 1.442695
    %v395 = vpow.pop %v394
    %v396 = vmul.f32 %v393, 1.442695
    %v397 = vpow.pop %v396
    %v398 = vadd.f32 %v395, 1.0
    %v399 = vadd.f32 %v397, 1.0
    %v400 = vrcp.pop %v398
    %v401 = vmul.f32 1.0, %v400
    %v402 = vrcp.pop %v399
    %v403 = vmul.f32 1.0, %v402
    %v404 = vtanh.pop %v391
    %v405 = vmul.f32 %v401, 0.0
    %v406 = vmul.f32 %v401, %v404
    %408 = vrot.lane.b32.xlu0 %v406, 64
    %v409 = vpop.permute.xlu0 %408
    %v411 = vadd.f32 %v405, %v409
    %v412 = vtanh.pop %v411
    %v413 = vmul.f32 %v403, %v412
    %415 = vset.pattern.permute.xlu0 0
    %416 = vperm.xlu0 %415, %v303
    %v417 = vpop.permute.xlu0 %416
    %420 = vset.pattern.permute.xlu0 0
    %421 = vperm.xlu0 %420, %v306
    %v422 = vpop.permute.xlu0 %421
    %v424 = vsel %vm300, %v417, %v422
    %426 = vrot.lane.b32.xlu0 %v413, 64
    %v427 = vpop.permute.xlu0 %426
    %v429 = vmul.f32 %v424, %v427
    %v430 = vsub.f32 1.0, %v424
    %v431 = vmul.f32 %v430, 0.0
    %v432 = vadd.f32 %v429, %v431
    %434 = vrot.lane.b32.xlu0 %v411, 64
    %v435 = vpop.permute.xlu0 %434
    %v437 = vmul.f32 %v424, %v435
    %v438 = vadd.f32 %v437, %v431
    %v439 = vmul.f32 %v432, %v417
    %v440 = vmul.f32 %v432, %v422
    %vm441 = vcmp.gt.s32.totalorder %v272, 1
    %v442 = vsel %vm441, 1, 0
    %v443 = vcvt.s32.f32 %v442
    %vm444 = vcmp.gt.s32.totalorder %v272, 6
    %v445 = vsel %vm444, 1, 0
    %v446 = vcvt.s32.f32 %v445
    %v447 = vrot.slane %v252, 2
    %v448 = vrot.slane %v254, 2
    %v451 = vsel %vm298, %v246, %v447
    %v452 = vsel %vm299, %v248, %v448
    %v454 = vsel %vm315, %v432, 0
    %456 = vmatprep.subr.mxu0 0.0
    %457 = vmatpush1.msra.mxu0 0.0
    %458 = vmatprep.subr.mxu0 0.0
    %459 = vmatpush1.msra.mxu0 0.0
    %460 = vmatprep.subr.mxu0 0.0
    %461 = vmatpush1.msra.mxu0 0.0
    %462 = vmatprep.subr.mxu0 0.0
    %463 = vmatpush1.msra.mxu0 0.0
    %464 = vmatprep.subr.mxu0 0.0
    %465 = vmatpush1.msra.mxu0 0.0
    %466 = vmatprep.subr.mxu0 0.0
    %467 = vmatpush1.msra.mxu0 0.0
    %468 = vmatprep.subr.mxu0 0.0
    %469 = vmatpush1.msra.mxu0 0.0
    %470 = vmatprep.subr.mxu0 0.0
    %471 = vmatpush1.msra.mxu0 0.0
    %472 = vmatprep.subr.mxu0 %v271
    %473 = vmatpush1.msra.mxu0 %v270
    %474 = vmatprep.subr.mxu0 %v269
    %475 = vmatpush1.msra.mxu0 %v268
    %476 = vmatprep.subr.mxu0 %v267
    %477 = vmatpush1.msra.mxu0 %v266
    %478 = vmatprep.subr.mxu0 %v265
    %479 = vmatpush1.msra.mxu0 %v264
    %480 = vmatprep.subr.mxu0 %v263
    %481 = vmatpush1.msra.mxu0 %v262
    %482 = vmatprep.subr.mxu0 %v261
    %483 = vmatpush1.msra.mxu0 %v260
    %484 = vmatprep.subr.mxu0 %v259
    %485 = vmatpush1.msra.mxu0 %v258
    %486 = vmatprep.subr.mxu0 %v257
    %487 = vmatpush1.msra.mxu0 %v256
    %488 = vmatprep.subr.mxu0 0.0
    %489 = vmatpush2.msra.mxu0 0.0
    %490 = vmatprep.subr.mxu0 0.0
    %491 = vmatpush2.msra.mxu0 0.0
    %492 = vmatprep.subr.mxu0 0.0
    %493 = vmatpush2.msra.mxu0 0.0
    %494 = vmatprep.subr.mxu0 0.0
    %495 = vmatpush2.msra.mxu0 0.0
    %496 = vmatprep.subr.mxu0 0.0
    %497 = vmatpush2.msra.mxu0 0.0
    %498 = vmatprep.subr.mxu0 0.0
    %499 = vmatpush2.msra.mxu0 0.0
    %500 = vmatprep.subr.mxu0 0.0
    %501 = vmatpush2.msra.mxu0 0.0
    %502 = vmatprep.subr.mxu0 0.0
    %503 = vmatpush2.msra.mxu0 0.0
    %504 = vmatprep.subr.mxu0 0.0
    %505 = vmatpush2.msra.mxu0 0.0
    %506 = vmatprep.subr.mxu0 0.0
    %507 = vmatpush2.msra.mxu0 0.0
    %508 = vmatprep.subr.mxu0 0.0
    %509 = vmatpush2.msra.mxu0 0.0
    %510 = vmatprep.subr.mxu0 0.0
    %511 = vmatpush2.msra.mxu0 0.0
    %512 = vmatprep.subr.mxu0 0.0
    %513 = vmatpush2.msra.mxu0 0.0
    %514 = vmatprep.subr.mxu0 0.0
    %515 = vmatpush2.msra.mxu0 0.0
    %516 = vmatprep.subr.mxu0 0.0
    %517 = vmatpush2.msra.mxu0 0.0
    %518 = vmatprep.subr.mxu0 0.0
    %519 = vmatpush2.msra.mxu0 0.0
    %520 = vmatprep.mubr.f32.mxu0 0.0
    %521 = vmatmul.mubr.f32.gmra.mxu0 %v454
    %v522 = vpop.f32.mrf.mxu0
    %v523 = vadd.f32 0.0, %v522
    %v524 = vpop.f32.mrf.mxu0
    %v525 = vadd.f32 0.0, %v524
    %526 = vdwg.mxu0
    %v529 = vrot.slane %v523, 6
    %v530 = vrot.slane %v525, 6
    %v533 = vadd.f32 %v451, %v529
    %v534 = vadd.f32 %v452, %v530
    %v535 = vxor.u32 %v533, 2147483648
    %v536 = vxor.u32 %v534, 2147483648
    %v537 = vmul.f32 %v535, 1.442695
    %v538 = vpow.pop %v537
    %v539 = vmul.f32 %v536, 1.442695
    %v540 = vpow.pop %v539
    %v541 = vadd.f32 %v538, 1.0
    %v542 = vadd.f32 %v540, 1.0
    %v543 = vrcp.pop %v541
    %v544 = vmul.f32 1.0, %v543
    %v545 = vrcp.pop %v542
    %v546 = vmul.f32 1.0, %v545
    %v547 = vtanh.pop %v534
    %v549 = vrot.slane %v438, 6
    %550 = vrot.lane.b32.xlu0 %v549, 64
    %v551 = vpop.permute.xlu0 %550
    %v553 = vmul.f32 %v544, %v551
    %v554 = vmul.f32 %v544, %v547
    %556 = vrot.lane.b32.xlu0 %v554, 64
    %v557 = vpop.permute.xlu0 %556
    %v559 = vadd.f32 %v553, %v557
    %v560 = vtanh.pop %v559
    %v561 = vmul.f32 %v546, %v560
    %563 = vset.pattern.permute.xlu0 0
    %564 = vperm.xlu0 %563, %v443
    %v565 = vpop.permute.xlu0 %564
    %568 = vset.pattern.permute.xlu0 0
    %569 = vperm.xlu0 %568, %v446
    %v570 = vpop.permute.xlu0 %569
    %v572 = vsel %vm300, %v565, %v570
    %v574 = vrot.slane %v561, 2
    %575 = vrot.lane.b32.xlu0 %v574, 64
    %v576 = vpop.permute.xlu0 %575
    %v578 = vmul.f32 %v572, %v576
    %v579 = vsub.f32 1.0, %v572
    %v580 = vmul.f32 %v579, %v432
    %v581 = vadd.f32 %v578, %v580
    %v583 = vrot.slane %v559, 2
    %584 = vrot.lane.b32.xlu0 %v583, 64
    %v585 = vpop.permute.xlu0 %584
    %v587 = vmul.f32 %v572, %v585
    %v588 = vmul.f32 %v579, %v438
    %v589 = vadd.f32 %v587, %v588
    %v590 = vmul.f32 %v581, %v565
    %v591 = vmul.f32 %v581, %v570
    %vm592 = vcmp.gt.s32.totalorder %v272, 2
    %v593 = vsel %vm592, 1, 0
    %v594 = vcvt.s32.f32 %v593
    %vm595 = vcmp.gt.s32.totalorder %v272, 5
    %v596 = vsel %vm595, 1, 0
    %v597 = vcvt.s32.f32 %v596
    %v599 = vsel %vm315, %v581, 0
    %601 = vmatprep.subr.mxu0 0.0
    %602 = vmatpush1.msra.mxu0 0.0
    %603 = vmatprep.subr.mxu0 0.0
    %604 = vmatpush1.msra.mxu0 0.0
    %605 = vmatprep.subr.mxu0 0.0
    %606 = vmatpush1.msra.mxu0 0.0
    %607 = vmatprep.subr.mxu0 0.0
    %608 = vmatpush1.msra.mxu0 0.0
    %609 = vmatprep.subr.mxu0 0.0
    %610 = vmatpush1.msra.mxu0 0.0
    %611 = vmatprep.subr.mxu0 0.0
    %612 = vmatpush1.msra.mxu0 0.0
    %613 = vmatprep.subr.mxu0 0.0
    %614 = vmatpush1.msra.mxu0 0.0
    %615 = vmatprep.subr.mxu0 0.0
    %616 = vmatpush1.msra.mxu0 0.0
    %617 = vmatprep.subr.mxu0 %v271
    %618 = vmatpush1.msra.mxu0 %v270
    %619 = vmatprep.subr.mxu0 %v269
    %620 = vmatpush1.msra.mxu0 %v268
    %621 = vmatprep.subr.mxu0 %v267
    %622 = vmatpush1.msra.mxu0 %v266
    %623 = vmatprep.subr.mxu0 %v265
    %624 = vmatpush1.msra.mxu0 %v264
    %625 = vmatprep.subr.mxu0 %v263
    %626 = vmatpush1.msra.mxu0 %v262
    %627 = vmatprep.subr.mxu0 %v261
    %628 = vmatpush1.msra.mxu0 %v260
    %629 = vmatprep.subr.mxu0 %v259
    %630 = vmatpush1.msra.mxu0 %v258
    %631 = vmatprep.subr.mxu0 %v257
    %632 = vmatpush1.msra.mxu0 %v256
    %633 = vmatprep.subr.mxu0 0.0
    %634 = vmatpush2.msra.mxu0 0.0
    %635 = vmatprep.subr.mxu0 0.0
    %636 = vmatpush2.msra.mxu0 0.0
    %637 = vmatprep.subr.mxu0 0.0
    %638 = vmatpush2.msra.mxu0 0.0
    %639 = vmatprep.subr.mxu0 0.0
    %640 = vmatpush2.msra.mxu0 0.0
    %641 = vmatprep.subr.mxu0 0.0
    %642 = vmatpush2.msra.mxu0 0.0
    %643 = vmatprep.subr.mxu0 0.0
    %644 = vmatpush2.msra.mxu0 0.0
    %645 = vmatprep.subr.mxu0 0.0
    %646 = vmatpush2.msra.mxu0 0.0
    %647 = vmatprep.subr.mxu0 0.0
    %648 = vmatpush2.msra.mxu0 0.0
    %649 = vmatprep.subr.mxu0 0.0
    %650 = vmatpush2.msra.mxu0 0.0
    %651 = vmatprep.subr.mxu0 0.0
    %652 = vmatpush2.msra.mxu0 0.0
    %653 = vmatprep.subr.mxu0 0.0
    %654 = vmatpush2.msra.mxu0 0.0
    %655 = vmatprep.subr.mxu0 0.0
    %656 = vmatpush2.msra.mxu0 0.0
    %657 = vmatprep.subr.mxu0 0.0
    %658 = vmatpush2.msra.mxu0 0.0
    %659 = vmatprep.subr.mxu0 0.0
    %660 = vmatpush2.msra.mxu0 0.0
    %661 = vmatprep.subr.mxu0 0.0
    %662 = vmatpush2.msra.mxu0 0.0
    %663 = vmatprep.subr.mxu0 0.0
    %664 = vmatpush2.msra.mxu0 0.0
    %665 = vmatprep.mubr.f32.mxu0 0.0
    %666 = vmatmul.mubr.f32.gmra.mxu0 %v599
    %v667 = vpop.f32.mrf.mxu0
    %v668 = vadd.f32 0.0, %v667
    %v669 = vpop.f32.mrf.mxu0
    %v670 = vadd.f32 0.0, %v669
    %671 = vdwg.mxu0
    %v674 = vrot.slane %v668, 4
    %v675 = vrot.slane %v670, 4
    %v678 = vadd.f32 %v313, %v674
    %v679 = vadd.f32 %v314, %v675
    %v680 = vxor.u32 %v678, 2147483648
    %v681 = vxor.u32 %v679, 2147483648
    %v682 = vmul.f32 %v680, 1.442695
    %v683 = vpow.pop %v682
    %v684 = vmul.f32 %v681, 1.442695
    %v685 = vpow.pop %v684
    %v686 = vadd.f32 %v683, 1.0
    %v687 = vadd.f32 %v685, 1.0
    %v688 = vrcp.pop %v686
    %v689 = vmul.f32 1.0, %v688
    %v690 = vrcp.pop %v687
    %v691 = vmul.f32 1.0, %v690
    %v692 = vtanh.pop %v679
    %v694 = vrot.slane %v589, 4
    %695 = vrot.lane.b32.xlu0 %v694, 64
    %v696 = vpop.permute.xlu0 %695
    %v698 = vmul.f32 %v689, %v696
    %v699 = vmul.f32 %v689, %v692
    %701 = vrot.lane.b32.xlu0 %v699, 64
    %v702 = vpop.permute.xlu0 %701
    %v704 = vadd.f32 %v698, %v702
    %v705 = vtanh.pop %v704
    %v706 = vmul.f32 %v691, %v705
    %708 = vset.pattern.permute.xlu0 0
    %709 = vperm.xlu0 %708, %v594
    %v710 = vpop.permute.xlu0 %709
    %713 = vset.pattern.permute.xlu0 0
    %714 = vperm.xlu0 %713, %v597
    %v715 = vpop.permute.xlu0 %714
    %v717 = vsel %vm300, %v710, %v715
    %v719 = vrot.slane %v706, 4
    %720 = vrot.lane.b32.xlu0 %v719, 64
    %v721 = vpop.permute.xlu0 %720
    %v723 = vmul.f32 %v717, %v721
    %v724 = vsub.f32 1.0, %v717
    %v725 = vmul.f32 %v724, %v581
    %v726 = vadd.f32 %v723, %v725
    %v728 = vrot.slane %v704, 4
    %729 = vrot.lane.b32.xlu0 %v728, 64
    %v730 = vpop.permute.xlu0 %729
    %v732 = vmul.f32 %v717, %v730
    %v733 = vmul.f32 %v724, %v589
    %v734 = vadd.f32 %v732, %v733
    %v735 = vmul.f32 %v726, %v710
    %v736 = vmul.f32 %v726, %v715
    %vm737 = vcmp.gt.s32.totalorder %v272, 3
    %v738 = vsel %vm737, 1, 0
    %v739 = vcvt.s32.f32 %v738
    %vm740 = vcmp.gt.s32.totalorder %v272, 4
    %v741 = vsel %vm740, 1, 0
    %v742 = vcvt.s32.f32 %v741
    %v744 = vsel %vm315, %v726, 0
    %746 = vmatprep.subr.mxu0 0.0
    %747 = vmatpush1.msra.mxu0 0.0
    %748 = vmatprep.subr.mxu0 0.0
    %749 = vmatpush1.msra.mxu0 0.0
    %750 = vmatprep.subr.mxu0 0.0
    %751 = vmatpush1.msra.mxu0 0.0
    %752 = vmatprep.subr.mxu0 0.0
    %753 = vmatpush1.msra.mxu0 0.0
    %754 = vmatprep.subr.mxu0 0.0
    %755 = vmatpush1.msra.mxu0 0.0
    %756 = vmatprep.subr.mxu0 0.0
    %757 = vmatpush1.msra.mxu0 0.0
    %758 = vmatprep.subr.mxu0 0.0
    %759 = vmatpush1.msra.mxu0 0.0
    %760 = vmatprep.subr.mxu0 0.0
    %761 = vmatpush1.msra.mxu0 0.0
    %762 = vmatprep.subr.mxu0 %v271
    %763 = vmatpush1.msra.mxu0 %v270
    %764 = vmatprep.subr.mxu0 %v269
    %765 = vmatpush1.msra.mxu0 %v268
    %766 = vmatprep.subr.mxu0 %v267
    %767 = vmatpush1.msra.mxu0 %v266
    %768 = vmatprep.subr.mxu0 %v265
    %769 = vmatpush1.msra.mxu0 %v264
    %770 = vmatprep.subr.mxu0 %v263
    %771 = vmatpush1.msra.mxu0 %v262
    %772 = vmatprep.subr.mxu0 %v261
    %773 = vmatpush1.msra.mxu0 %v260
    %774 = vmatprep.subr.mxu0 %v259
    %775 = vmatpush1.msra.mxu0 %v258
    %776 = vmatprep.subr.mxu0 %v257
    %777 = vmatpush1.msra.mxu0 %v256
    %778 = vmatprep.subr.mxu0 0.0
    %779 = vmatpush2.msra.mxu0 0.0
    %780 = vmatprep.subr.mxu0 0.0
    %781 = vmatpush2.msra.mxu0 0.0
    %782 = vmatprep.subr.mxu0 0.0
    %783 = vmatpush2.msra.mxu0 0.0
    %784 = vmatprep.subr.mxu0 0.0
    %785 = vmatpush2.msra.mxu0 0.0
    %786 = vmatprep.subr.mxu0 0.0
    %787 = vmatpush2.msra.mxu0 0.0
    %788 = vmatprep.subr.mxu0 0.0
    %789 = vmatpush2.msra.mxu0 0.0
    %790 = vmatprep.subr.mxu0 0.0
    %791 = vmatpush2.msra.mxu0 0.0
    %792 = vmatprep.subr.mxu0 0.0
    %793 = vmatpush2.msra.mxu0 0.0
    %794 = vmatprep.subr.mxu0 0.0
    %795 = vmatpush2.msra.mxu0 0.0
    %796 = vmatprep.subr.mxu0 0.0
    %797 = vmatpush2.msra.mxu0 0.0
    %798 = vmatprep.subr.mxu0 0.0
    %799 = vmatpush2.msra.mxu0 0.0
    %800 = vmatprep.subr.mxu0 0.0
    %801 = vmatpush2.msra.mxu0 0.0
    %802 = vmatprep.subr.mxu0 0.0
    %803 = vmatpush2.msra.mxu0 0.0
    %804 = vmatprep.subr.mxu0 0.0
    %805 = vmatpush2.msra.mxu0 0.0
    %806 = vmatprep.subr.mxu0 0.0
    %807 = vmatpush2.msra.mxu0 0.0
    %808 = vmatprep.subr.mxu0 0.0
    %809 = vmatpush2.msra.mxu0 0.0
    %810 = vmatprep.mubr.f32.mxu0 0.0
    %811 = vmatmul.mubr.f32.gmra.mxu0 %v744
    %v812 = vpop.f32.mrf.mxu0
    %v813 = vadd.f32 0.0, %v812
    %v814 = vpop.f32.mrf.mxu0
    %v815 = vadd.f32 0.0, %v814
    %816 = vdwg.mxu0
    %v819 = vrot.slane %v813, 2
    %v820 = vrot.slane %v815, 2
    %v823 = vadd.f32 %v451, %v819
    %v824 = vadd.f32 %v452, %v820
    %v825 = vxor.u32 %v823, 2147483648
    %v826 = vxor.u32 %v824, 2147483648
    %v827 = vmul.f32 %v825, 1.442695
    %v828 = vpow.pop %v827
    %v829 = vmul.f32 %v826, 1.442695
    %v830 = vpow.pop %v829
    %v831 = vadd.f32 %v828, 1.0
    %v832 = vadd.f32 %v830, 1.0
    %v833 = vrcp.pop %v831
    %v834 = vmul.f32 1.0, %v833
    %v835 = vrcp.pop %v832
    %v836 = vmul.f32 1.0, %v835
    %v837 = vtanh.pop %v824
    %v839 = vrot.slane %v734, 2
    %840 = vrot.lane.b32.xlu0 %v839, 64
    %v841 = vpop.permute.xlu0 %840
    %v843 = vmul.f32 %v834, %v841
    %v844 = vmul.f32 %v834, %v837
    %846 = vrot.lane.b32.xlu0 %v844, 64
    %v847 = vpop.permute.xlu0 %846
    %v849 = vadd.f32 %v843, %v847
    %v850 = vtanh.pop %v849
    %v851 = vmul.f32 %v836, %v850
    %853 = vset.pattern.permute.xlu0 0
    %854 = vperm.xlu0 %853, %v739
    %v855 = vpop.permute.xlu0 %854
    %858 = vset.pattern.permute.xlu0 0
    %859 = vperm.xlu0 %858, %v742
    %v860 = vpop.permute.xlu0 %859
    %v862 = vsel %vm300, %v855, %v860
    %v864 = vrot.slane %v851, 6
    %865 = vrot.lane.b32.xlu0 %v864, 64
    %v866 = vpop.permute.xlu0 %865
    %v868 = vmul.f32 %v862, %v866
    %v869 = vsub.f32 1.0, %v862
    %v870 = vmul.f32 %v869, %v726
    %v871 = vadd.f32 %v868, %v870
    %v873 = vrot.slane %v849, 6
    %874 = vrot.lane.b32.xlu0 %v873, 64
    %v875 = vpop.permute.xlu0 %874
    %v877 = vmul.f32 %v862, %v875
    %v878 = vmul.f32 %v869, %v734
    %v879 = vadd.f32 %v877, %v878
    %v880 = vmul.f32 %v871, %v855
    %v881 = vmul.f32 %v871, %v860
    %v884 = vrot.slane %v246, 6
    %v885 = vrot.slane %v248, 6
    %v888 = vsel %vm298, %v252, %v884
    %v889 = vsel %vm299, %v254, %v885
    %v891 = vsel %vm315, %v871, 0
    %893 = vmatprep.subr.mxu0 0.0
    %894 = vmatpush1.msra.mxu0 0.0
    %895 = vmatprep.subr.mxu0 0.0
    %896 = vmatpush1.msra.mxu0 0.0
    %897 = vmatprep.subr.mxu0 0.0
    %898 = vmatpush1.msra.mxu0 0.0
    %899 = vmatprep.subr.mxu0 0.0
    %900 = vmatpush1.msra.mxu0 0.0
    %901 = vmatprep.subr.mxu0 0.0
    %902 = vmatpush1.msra.mxu0 0.0
    %903 = vmatprep.subr.mxu0 0.0
    %904 = vmatpush1.msra.mxu0 0.0
    %905 = vmatprep.subr.mxu0 0.0
    %906 = vmatpush1.msra.mxu0 0.0
    %907 = vmatprep.subr.mxu0 0.0
    %908 = vmatpush1.msra.mxu0 0.0
    %909 = vmatprep.subr.mxu0 %v271
    %910 = vmatpush1.msra.mxu0 %v270
    %911 = vmatprep.subr.mxu0 %v269
    %912 = vmatpush1.msra.mxu0 %v268
    %913 = vmatprep.subr.mxu0 %v267
    %914 = vmatpush1.msra.mxu0 %v266
    %915 = vmatprep.subr.mxu0 %v265
    %916 = vmatpush1.msra.mxu0 %v264
    %917 = vmatprep.subr.mxu0 %v263
    %918 = vmatpush1.msra.mxu0 %v262
    %919 = vmatprep.subr.mxu0 %v261
    %920 = vmatpush1.msra.mxu0 %v260
    %921 = vmatprep.subr.mxu0 %v259
    %922 = vmatpush1.msra.mxu0 %v258
    %923 = vmatprep.subr.mxu0 %v257
    %924 = vmatpush1.msra.mxu0 %v256
    %925 = vmatprep.subr.mxu0 0.0
    %926 = vmatpush2.msra.mxu0 0.0
    %927 = vmatprep.subr.mxu0 0.0
    %928 = vmatpush2.msra.mxu0 0.0
    %929 = vmatprep.subr.mxu0 0.0
    %930 = vmatpush2.msra.mxu0 0.0
    %931 = vmatprep.subr.mxu0 0.0
    %932 = vmatpush2.msra.mxu0 0.0
    %933 = vmatprep.subr.mxu0 0.0
    %934 = vmatpush2.msra.mxu0 0.0
    %935 = vmatprep.subr.mxu0 0.0
    %936 = vmatpush2.msra.mxu0 0.0
    %937 = vmatprep.subr.mxu0 0.0
    %938 = vmatpush2.msra.mxu0 0.0
    %939 = vmatprep.subr.mxu0 0.0
    %940 = vmatpush2.msra.mxu0 0.0
    %941 = vmatprep.subr.mxu0 0.0
    %942 = vmatpush2.msra.mxu0 0.0
    %943 = vmatprep.subr.mxu0 0.0
    %944 = vmatpush2.msra.mxu0 0.0
    %945 = vmatprep.subr.mxu0 0.0
    %946 = vmatpush2.msra.mxu0 0.0
    %947 = vmatprep.subr.mxu0 0.0
    %948 = vmatpush2.msra.mxu0 0.0
    %949 = vmatprep.subr.mxu0 0.0
    %950 = vmatpush2.msra.mxu0 0.0
    %951 = vmatprep.subr.mxu0 0.0
    %952 = vmatpush2.msra.mxu0 0.0
    %953 = vmatprep.subr.mxu0 0.0
    %954 = vmatpush2.msra.mxu0 0.0
    %955 = vmatprep.subr.mxu0 0.0
    %956 = vmatpush2.msra.mxu0 0.0
    %957 = vmatprep.mubr.f32.mxu0 0.0
    %958 = vmatmul.mubr.f32.gmra.mxu0 %v891
    %v959 = vpop.f32.mrf.mxu0
    %v960 = vadd.f32 0.0, %v959
    %v961 = vpop.f32.mrf.mxu0
    %v962 = vadd.f32 0.0, %v961
    %963 = vdwg.mxu0
    %v964 = vadd.f32 %v888, %v960
    %v965 = vadd.f32 %v889, %v962
    %v966 = vxor.u32 %v964, 2147483648
    %v967 = vxor.u32 %v965, 2147483648
    %v968 = vmul.f32 %v966, 1.442695
    %v969 = vpow.pop %v968
    %v970 = vmul.f32 %v967, 1.442695
    %v971 = vpow.pop %v970
    %v972 = vadd.f32 %v969, 1.0
    %v973 = vadd.f32 %v971, 1.0
    %v974 = vrcp.pop %v972
    %v975 = vmul.f32 1.0, %v974
    %v976 = vrcp.pop %v973
    %v977 = vmul.f32 1.0, %v976
    %v978 = vtanh.pop %v965
    %980 = vrot.lane.b32.xlu0 %v879, 64
    %v981 = vpop.permute.xlu0 %980
    %v983 = vmul.f32 %v975, %v981
    %v984 = vmul.f32 %v975, %v978
    %986 = vrot.lane.b32.xlu0 %v984, 64
    %v987 = vpop.permute.xlu0 %986
    %v989 = vadd.f32 %v983, %v987
    %v990 = vtanh.pop %v989
    %v991 = vmul.f32 %v977, %v990
    %v992 = vsel %vm300, %v860, %v855
    %994 = vrot.lane.b32.xlu0 %v991, 64
    %v995 = vpop.permute.xlu0 %994
    %v997 = vmul.f32 %v992, %v995
    %v998 = vsub.f32 1.0, %v992
    %v999 = vmul.f32 %v998, %v871
    %v1000 = vadd.f32 %v997, %v999
    %1002 = vrot.lane.b32.xlu0 %v989, 64
    %v1003 = vpop.permute.xlu0 %1002
    %v1005 = vmul.f32 %v992, %v1003
    %v1006 = vmul.f32 %v998, %v879
    %v1007 = vadd.f32 %v1005, %v1006
    %v1008 = vmul.f32 %v1000, %v860
    %v1009 = vmul.f32 %v1000, %v855
    %v1010 = vrot.slane %v246, 2
    %v1011 = vrot.slane %v248, 2
    %v1014 = vsel %vm298, %v252, %v1010
    %v1015 = vsel %vm299, %v254, %v1011
    %v1017 = vsel %vm315, %v1000, 0
    %1019 = vmatprep.subr.mxu0 0.0
    %1020 = vmatpush1.msra.mxu0 0.0
    %1021 = vmatprep.subr.mxu0 0.0
    %1022 = vmatpush1.msra.mxu0 0.0
    %1023 = vmatprep.subr.mxu0 0.0
    %1024 = vmatpush1.msra.mxu0 0.0
    %1025 = vmatprep.subr.mxu0 0.0
    %1026 = vmatpush1.msra.mxu0 0.0
    %1027 = vmatprep.subr.mxu0 0.0
    %1028 = vmatpush1.msra.mxu0 0.0
    %1029 = vmatprep.subr.mxu0 0.0
    %1030 = vmatpush1.msra.mxu0 0.0
    %1031 = vmatprep.subr.mxu0 0.0
    %1032 = vmatpush1.msra.mxu0 0.0
    %1033 = vmatprep.subr.mxu0 0.0
    %1034 = vmatpush1.msra.mxu0 0.0
    %1035 = vmatprep.subr.mxu0 %v271
    %1036 = vmatpush1.msra.mxu0 %v270
    %1037 = vmatprep.subr.mxu0 %v269
    %1038 = vmatpush1.msra.mxu0 %v268
    %1039 = vmatprep.subr.mxu0 %v267
    %1040 = vmatpush1.msra.mxu0 %v266
    %1041 = vmatprep.subr.mxu0 %v265
    %1042 = vmatpush1.msra.mxu0 %v264
    %1043 = vmatprep.subr.mxu0 %v263
    %1044 = vmatpush1.msra.mxu0 %v262
    %1045 = vmatprep.subr.mxu0 %v261
    %1046 = vmatpush1.msra.mxu0 %v260
    %1047 = vmatprep.subr.mxu0 %v259
    %1048 = vmatpush1.msra.mxu0 %v258
    %1049 = vmatprep.subr.mxu0 %v257
    %1050 = vmatpush1.msra.mxu0 %v256
    %1051 = vmatprep.subr.mxu0 0.0
    %1052 = vmatpush2.msra.mxu0 0.0
    %1053 = vmatprep.subr.mxu0 0.0
    %1054 = vmatpush2.msra.mxu0 0.0
    %1055 = vmatprep.subr.mxu0 0.0
    %1056 = vmatpush2.msra.mxu0 0.0
    %1057 = vmatprep.subr.mxu0 0.0
    %1058 = vmatpush2.msra.mxu0 0.0
    %1059 = vmatprep.subr.mxu0 0.0
    %1060 = vmatpush2.msra.mxu0 0.0
    %1061 = vmatprep.subr.mxu0 0.0
    %1062 = vmatpush2.msra.mxu0 0.0
    %1063 = vmatprep.subr.mxu0 0.0
    %1064 = vmatpush2.msra.mxu0 0.0
    %1065 = vmatprep.subr.mxu0 0.0
    %1066 = vmatpush2.msra.mxu0 0.0
    %1067 = vmatprep.subr.mxu0 0.0
    %1068 = vmatpush2.msra.mxu0 0.0
    %1069 = vmatprep.subr.mxu0 0.0
    %1070 = vmatpush2.msra.mxu0 0.0
    %1071 = vmatprep.subr.mxu0 0.0
    %1072 = vmatpush2.msra.mxu0 0.0
    %1073 = vmatprep.subr.mxu0 0.0
    %1074 = vmatpush2.msra.mxu0 0.0
    %1075 = vmatprep.subr.mxu0 0.0
    %1076 = vmatpush2.msra.mxu0 0.0
    %1077 = vmatprep.subr.mxu0 0.0
    %1078 = vmatpush2.msra.mxu0 0.0
    %1079 = vmatprep.subr.mxu0 0.0
    %1080 = vmatpush2.msra.mxu0 0.0
    %1081 = vmatprep.subr.mxu0 0.0
    %1082 = vmatpush2.msra.mxu0 0.0
    %1083 = vmatprep.mubr.f32.mxu0 0.0
    %1084 = vmatmul.mubr.f32.gmra.mxu0 %v1017
    %v1085 = vpop.f32.mrf.mxu0
    %v1086 = vadd.f32 0.0, %v1085
    %v1087 = vpop.f32.mrf.mxu0
    %v1088 = vadd.f32 0.0, %v1087
    %1089 = vdwg.mxu0
    %v1092 = vrot.slane %v1086, 6
    %v1093 = vrot.slane %v1088, 6
    %v1096 = vadd.f32 %v1014, %v1092
    %v1097 = vadd.f32 %v1015, %v1093
    %v1098 = vxor.u32 %v1096, 2147483648
    %v1099 = vxor.u32 %v1097, 2147483648
    %v1100 = vmul.f32 %v1098, 1.442695
    %v1101 = vpow.pop %v1100
    %v1102 = vmul.f32 %v1099, 1.442695
    %v1103 = vpow.pop %v1102
    %v1104 = vadd.f32 %v1101, 1.0
    %v1105 = vadd.f32 %v1103, 1.0
    %v1106 = vrcp.pop %v1104
    %v1107 = vmul.f32 1.0, %v1106
    %v1108 = vrcp.pop %v1105
    %v1109 = vmul.f32 1.0, %v1108
    %v1110 = vtanh.pop %v1097
    %v1112 = vrot.slane %v1007, 6
    %1113 = vrot.lane.b32.xlu0 %v1112, 64
    %v1114 = vpop.permute.xlu0 %1113
    %v1116 = vmul.f32 %v1107, %v1114
    %v1117 = vmul.f32 %v1107, %v1110
    %1119 = vrot.lane.b32.xlu0 %v1117, 64
    %v1120 = vpop.permute.xlu0 %1119
    %v1122 = vadd.f32 %v1116, %v1120
    %v1123 = vtanh.pop %v1122
    %v1124 = vmul.f32 %v1109, %v1123
    %v1125 = vsel %vm300, %v715, %v710
    %v1127 = vrot.slane %v1124, 2
    %1128 = vrot.lane.b32.xlu0 %v1127, 64
    %v1129 = vpop.permute.xlu0 %1128
    %v1131 = vmul.f32 %v1125, %v1129
    %v1132 = vsub.f32 1.0, %v1125
    %v1133 = vmul.f32 %v1132, %v1000
    %v1134 = vadd.f32 %v1131, %v1133
    %v1136 = vrot.slane %v1122, 2
    %1137 = vrot.lane.b32.xlu0 %v1136, 64
    %v1138 = vpop.permute.xlu0 %1137
    %v1140 = vmul.f32 %v1125, %v1138
    %v1141 = vmul.f32 %v1132, %v1007
    %v1142 = vadd.f32 %v1140, %v1141
    %v1143 = vmul.f32 %v1134, %v715
    %v1144 = vmul.f32 %v1134, %v710
    %v1146 = vsel %vm315, %v1134, 0
    %1148 = vmatprep.subr.mxu0 0.0
    %1149 = vmatpush1.msra.mxu0 0.0
    %1150 = vmatprep.subr.mxu0 0.0
    %1151 = vmatpush1.msra.mxu0 0.0
    %1152 = vmatprep.subr.mxu0 0.0
    %1153 = vmatpush1.msra.mxu0 0.0
    %1154 = vmatprep.subr.mxu0 0.0
    %1155 = vmatpush1.msra.mxu0 0.0
    %1156 = vmatprep.subr.mxu0 0.0
    %1157 = vmatpush1.msra.mxu0 0.0
    %1158 = vmatprep.subr.mxu0 0.0
    %1159 = vmatpush1.msra.mxu0 0.0
    %1160 = vmatprep.subr.mxu0 0.0
    %1161 = vmatpush1.msra.mxu0 0.0
    %1162 = vmatprep.subr.mxu0 0.0
    %1163 = vmatpush1.msra.mxu0 0.0
    %1164 = vmatprep.subr.mxu0 %v271
    %1165 = vmatpush1.msra.mxu0 %v270
    %1166 = vmatprep.subr.mxu0 %v269
    %1167 = vmatpush1.msra.mxu0 %v268
    %1168 = vmatprep.subr.mxu0 %v267
    %1169 = vmatpush1.msra.mxu0 %v266
    %1170 = vmatprep.subr.mxu0 %v265
    %1171 = vmatpush1.msra.mxu0 %v264
    %1172 = vmatprep.subr.mxu0 %v263
    %1173 = vmatpush1.msra.mxu0 %v262
    %1174 = vmatprep.subr.mxu0 %v261
    %1175 = vmatpush1.msra.mxu0 %v260
    %1176 = vmatprep.subr.mxu0 %v259
    %1177 = vmatpush1.msra.mxu0 %v258
    %1178 = vmatprep.subr.mxu0 %v257
    %1179 = vmatpush1.msra.mxu0 %v256
    %1180 = vmatprep.subr.mxu0 0.0
    %1181 = vmatpush2.msra.mxu0 0.0
    %1182 = vmatprep.subr.mxu0 0.0
    %1183 = vmatpush2.msra.mxu0 0.0
    %1184 = vmatprep.subr.mxu0 0.0
    %1185 = vmatpush2.msra.mxu0 0.0
    %1186 = vmatprep.subr.mxu0 0.0
    %1187 = vmatpush2.msra.mxu0 0.0
    %1188 = vmatprep.subr.mxu0 0.0
    %1189 = vmatpush2.msra.mxu0 0.0
    %1190 = vmatprep.subr.mxu0 0.0
    %1191 = vmatpush2.msra.mxu0 0.0
    %1192 = vmatprep.subr.mxu0 0.0
    %1193 = vmatpush2.msra.mxu0 0.0
    %1194 = vmatprep.subr.mxu0 0.0
    %1195 = vmatpush2.msra.mxu0 0.0
    %1196 = vmatprep.subr.mxu0 0.0
    %1197 = vmatpush2.msra.mxu0 0.0
    %1198 = vmatprep.subr.mxu0 0.0
    %1199 = vmatpush2.msra.mxu0 0.0
    %1200 = vmatprep.subr.mxu0 0.0
    %1201 = vmatpush2.msra.mxu0 0.0
    %1202 = vmatprep.subr.mxu0 0.0
    %1203 = vmatpush2.msra.mxu0 0.0
    %1204 = vmatprep.subr.mxu0 0.0
    %1205 = vmatpush2.msra.mxu0 0.0
    %1206 = vmatprep.subr.mxu0 0.0
    %1207 = vmatpush2.msra.mxu0 0.0
    %1208 = vmatprep.subr.mxu0 0.0
    %1209 = vmatpush2.msra.mxu0 0.0
    %1210 = vmatprep.subr.mxu0 0.0
    %1211 = vmatpush2.msra.mxu0 0.0
    %1212 = vmatprep.mubr.f32.mxu0 0.0
    %1213 = vmatmul.mubr.f32.gmra.mxu0 %v1146
    %v1214 = vpop.f32.mrf.mxu0
    %v1215 = vadd.f32 0.0, %v1214
    %v1216 = vpop.f32.mrf.mxu0
    %v1217 = vadd.f32 0.0, %v1216
    %1218 = vdwg.mxu0
    %v1221 = vrot.slane %v1215, 4
    %v1222 = vrot.slane %v1217, 4
    %v1225 = vadd.f32 %v888, %v1221
    %v1226 = vadd.f32 %v889, %v1222
    %v1227 = vxor.u32 %v1225, 2147483648
    %v1228 = vxor.u32 %v1226, 2147483648
    %v1229 = vmul.f32 %v1227, 1.442695
    %v1230 = vpow.pop %v1229
    %v1231 = vmul.f32 %v1228, 1.442695
    %v1232 = vpow.pop %v1231
    %v1233 = vadd.f32 %v1230, 1.0
    %v1234 = vadd.f32 %v1232, 1.0
    %v1235 = vrcp.pop %v1233
    %v1236 = vmul.f32 1.0, %v1235
    %v1237 = vrcp.pop %v1234
    %v1238 = vmul.f32 1.0, %v1237
    %v1239 = vtanh.pop %v1226
    %v1241 = vrot.slane %v1142, 4
    %1242 = vrot.lane.b32.xlu0 %v1241, 64
    %v1243 = vpop.permute.xlu0 %1242
    %v1245 = vmul.f32 %v1236, %v1243
    %v1246 = vmul.f32 %v1236, %v1239
    %1248 = vrot.lane.b32.xlu0 %v1246, 64
    %v1249 = vpop.permute.xlu0 %1248
    %v1251 = vadd.f32 %v1245, %v1249
    %v1252 = vtanh.pop %v1251
    %v1253 = vmul.f32 %v1238, %v1252
    %v1254 = vsel %vm300, %v570, %v565
    %v1256 = vrot.slane %v1253, 4
    %1257 = vrot.lane.b32.xlu0 %v1256, 64
    %v1258 = vpop.permute.xlu0 %1257
    %v1260 = vmul.f32 %v1254, %v1258
    %v1261 = vsub.f32 1.0, %v1254
    %v1262 = vmul.f32 %v1261, %v1134
    %v1263 = vadd.f32 %v1260, %v1262
    %v1265 = vrot.slane %v1251, 4
    %1266 = vrot.lane.b32.xlu0 %v1265, 64
    %v1267 = vpop.permute.xlu0 %1266
    %v1269 = vmul.f32 %v1254, %v1267
    %v1270 = vmul.f32 %v1261, %v1142
    %v1271 = vadd.f32 %v1269, %v1270
    %v1272 = vmul.f32 %v1263, %v570
    %v1273 = vmul.f32 %v1263, %v565
    %v1275 = vsel %vm315, %v1263, 0
    %1277 = vmatprep.subr.mxu0 0.0
    %1278 = vmatpush1.msra.mxu0 0.0
    %1279 = vmatprep.subr.mxu0 0.0
    %1280 = vmatpush1.msra.mxu0 0.0
    %1281 = vmatprep.subr.mxu0 0.0
    %1282 = vmatpush1.msra.mxu0 0.0
    %1283 = vmatprep.subr.mxu0 0.0
    %1284 = vmatpush1.msra.mxu0 0.0
    %1285 = vmatprep.subr.mxu0 0.0
    %1286 = vmatpush1.msra.mxu0 0.0
    %1287 = vmatprep.subr.mxu0 0.0
    %1288 = vmatpush1.msra.mxu0 0.0
    %1289 = vmatprep.subr.mxu0 0.0
    %1290 = vmatpush1.msra.mxu0 0.0
    %1291 = vmatprep.subr.mxu0 0.0
    %1292 = vmatpush1.msra.mxu0 0.0
    %1293 = vmatprep.subr.mxu0 %v271
    %1294 = vmatpush1.msra.mxu0 %v270
    %1295 = vmatprep.subr.mxu0 %v269
    %1296 = vmatpush1.msra.mxu0 %v268
    %1297 = vmatprep.subr.mxu0 %v267
    %1298 = vmatpush1.msra.mxu0 %v266
    %1299 = vmatprep.subr.mxu0 %v265
    %1300 = vmatpush1.msra.mxu0 %v264
    %1301 = vmatprep.subr.mxu0 %v263
    %1302 = vmatpush1.msra.mxu0 %v262
    %1303 = vmatprep.subr.mxu0 %v261
    %1304 = vmatpush1.msra.mxu0 %v260
    %1305 = vmatprep.subr.mxu0 %v259
    %1306 = vmatpush1.msra.mxu0 %v258
    %1307 = vmatprep.subr.mxu0 %v257
    %1308 = vmatpush1.msra.mxu0 %v256
    %1309 = vmatprep.subr.mxu0 0.0
    %1310 = vmatpush2.msra.mxu0 0.0
    %1311 = vmatprep.subr.mxu0 0.0
    %1312 = vmatpush2.msra.mxu0 0.0
    %1313 = vmatprep.subr.mxu0 0.0
    %1314 = vmatpush2.msra.mxu0 0.0
    %1315 = vmatprep.subr.mxu0 0.0
    %1316 = vmatpush2.msra.mxu0 0.0
    %1317 = vmatprep.subr.mxu0 0.0
    %1318 = vmatpush2.msra.mxu0 0.0
    %1319 = vmatprep.subr.mxu0 0.0
    %1320 = vmatpush2.msra.mxu0 0.0
    %1321 = vmatprep.subr.mxu0 0.0
    %1322 = vmatpush2.msra.mxu0 0.0
    %1323 = vmatprep.subr.mxu0 0.0
    %1324 = vmatpush2.msra.mxu0 0.0
    %1325 = vmatprep.subr.mxu0 0.0
    %1326 = vmatpush2.msra.mxu0 0.0
    %1327 = vmatprep.subr.mxu0 0.0
    %1328 = vmatpush2.msra.mxu0 0.0
    %1329 = vmatprep.subr.mxu0 0.0
    %1330 = vmatpush2.msra.mxu0 0.0
    %1331 = vmatprep.subr.mxu0 0.0
    %1332 = vmatpush2.msra.mxu0 0.0
    %1333 = vmatprep.subr.mxu0 0.0
    %1334 = vmatpush2.msra.mxu0 0.0
    %1335 = vmatprep.subr.mxu0 0.0
    %1336 = vmatpush2.msra.mxu0 0.0
    %1337 = vmatprep.subr.mxu0 0.0
    %1338 = vmatpush2.msra.mxu0 0.0
    %1339 = vmatprep.subr.mxu0 0.0
    %1340 = vmatpush2.msra.mxu0 0.0
    %1341 = vmatprep.mubr.f32.mxu0 0.0
    %1342 = vmatmul.mubr.f32.gmra.mxu0 %v1275
    %v1343 = vpop.f32.mrf.mxu0
    %v1344 = vadd.f32 0.0, %v1343
    %v1345 = vpop.f32.mrf.mxu0
    %v1346 = vadd.f32 0.0, %v1345
    %1347 = vdwg.mxu0
    %v1350 = vrot.slane %v1344, 2
    %v1351 = vrot.slane %v1346, 2
    %v1354 = vadd.f32 %v1014, %v1350
    %v1355 = vadd.f32 %v1015, %v1351
    %v1356 = vxor.u32 %v1354, 2147483648
    %v1357 = vxor.u32 %v1355, 2147483648
    %v1358 = vmul.f32 %v1356, 1.442695
    %v1359 = vpow.pop %v1358
    %v1360 = vmul.f32 %v1357, 1.442695
    %v1361 = vpow.pop %v1360
    %v1362 = vadd.f32 %v1359, 1.0
    %v1363 = vadd.f32 %v1361, 1.0
    %v1364 = vrcp.pop %v1362
    %v1365 = vmul.f32 1.0, %v1364
    %v1366 = vrcp.pop %v1363
    %v1367 = vmul.f32 1.0, %v1366
    %v1368 = vtanh.pop %v1355
    %v1370 = vrot.slane %v1271, 2
    %1371 = vrot.lane.b32.xlu0 %v1370, 64
    %v1372 = vpop.permute.xlu0 %1371
    %v1374 = vmul.f32 %v1365, %v1372
    %v1375 = vmul.f32 %v1365, %v1368
    %1377 = vrot.lane.b32.xlu0 %v1375, 64
    %v1378 = vpop.permute.xlu0 %1377
    %v1380 = vadd.f32 %v1374, %v1378
    %v1381 = vtanh.pop %v1380
    %v1382 = vmul.f32 %v1367, %v1381
    %v1383 = vsel %vm300, %v422, %v417
    %v1385 = vrot.slane %v1382, 6
    %1386 = vrot.lane.b32.xlu0 %v1385, 64
    %v1387 = vpop.permute.xlu0 %1386
    %v1389 = vmul.f32 %v1383, %v1387
    %v1390 = vsub.f32 1.0, %v1383
    %v1391 = vmul.f32 %v1390, %v1263
    %v1392 = vadd.f32 %v1389, %v1391
    %v1393 = vmul.f32 %v1392, %v422
    %v1394 = vmul.f32 %v1392, %v417
    %v1395 = vsel %vm172, %v439, %v1394
    %v1396 = vsel %vm172, %v590, %v1273
    %v1397 = vsel %vm172, %v735, %v1144
    %v1398 = vsel %vm172, %v880, %v1009
    %v1399 = vsel %vm172, %v1008, %v881
    %v1400 = vsel %vm172, %v1143, %v736
    %v1401 = vsel %vm172, %v1272, %v591
    %v1402 = vsel %vm172, %v1393, %v440
    %vm1403 = vcmask 517120
    %1404 = vst.msk [vmem:[%s6] sm:$0x3] %vm1403, %v1395
    %1405 = vst.msk [vmem:[%s6 + $0x2] sm:$0x3] %vm1403, %v1396
    %1406 = vst.msk [vmem:[%s6 + $0x4] sm:$0x3] %vm1403, %v1397
    %1407 = vst.msk [vmem:[%s6 + $0x6] sm:$0x3] %vm1403, %v1398
    %1408 = vst.msk [vmem:[%s6 + $0x8] sm:$0x3] %vm1403, %v1399
    %1409 = vst.msk [vmem:[%s6 + $0xa] sm:$0x3] %vm1403, %v1400
    %1410 = vst.msk [vmem:[%s6 + $0xc] sm:$0x3] %vm1403, %v1401
    %1411 = vst.msk [vmem:[%s6 + $0xe] sm:$0x3] %vm1403, %v1402
    // Predicated region
    $region34: #{gate_model_forward.1} parent=1 // pred_check
      _
    $region35: #{gate_model_forward.1} parent=1 // pred_check_branch
      %1413 = sbr.rel (0) target = $region37
    $region36: #{gate_model_forward.1} parent=1 // pred_region
      _
    $region37: #{gate_model_forward.1} parent=1 // pred_fallthru
      _
    // Predicated region
    $region38: #{gate_model_forward.1} parent=1 // pred_check
      _
    $region39: #{gate_model_forward.1} parent=1 // pred_check_branch
      %1415 = sbr.rel (0) target = $region41
    $region40: #{gate_model_forward.1} parent=1 // pred_region
      _
    $region41: #{gate_model_forward.1} parent=1 // pred_fallthru
      _
    %1416 = vsyncpa [#allocation3], 1
    %1417 = vsyncpa [#allocation5], 1

</llo_original>
